<compile_context>
chip_gen: v6e
topology: v6e:2x2x1
jax: 0.10.0
libtpu: 0.0.40
codegen_flags: <defaults>
</compile_context>

<pallas_src>
import functools

import jax
import jax.numpy as jnp
from jax.experimental import pallas as pl
from jax.experimental.pallas import tpu as pltpu


# ---------------------------------------------------------------------------
# Fused Pallas kernel: (conv+ReLU) x num_layers -> FC1 -> FC2, one sample/step
# ---------------------------------------------------------------------------
def fused_forward_kernel(x_ref, p_ref, o_ref, xt_ref, *h_scratch,
                         stride, kernel_size, l_outs, c_ins, filters,
                         num_classes, offs):
    """Refs:
      x_ref     : (C_in, L)        one sample, raw PyTorch NCL orientation
      p_ref     : (R, filters)     packed parameters (single DMA)
      o_ref     : (1, num_classes) output row for this sample
      xt_ref    : (L, C_in)        VMEM scratch: channels-last view of the sample
      h_scratch : (l_outs[i], filters) VMEM scratch for conv outputs i < last
    """
    num_layers = len(l_outs)

    # NCL -> channels-last once, in VMEM (replaces the old host-side swapaxes,
    # which re-wrote the whole input through HBM before the kernel ran).
    xt_ref[...] = x_ref[...].T

    def conv_relu(src_ref, l_out, c_in, w_off, b_off):
        # K accumulated per-tap MXU matmuls; taps are sublane-strided ref reads.
        acc = None
        for k in range(kernel_size):
            tap = src_ref[pl.ds(k, l_out, stride=stride), :]            # (l_out, c_in)
            w_k = p_ref[pl.ds(w_off + k * c_in, c_in), :]               # (c_in, filters)
            contrib = jnp.dot(tap, w_k, preferred_element_type=jnp.float32)
            acc = contrib if acc is None else acc + contrib
        bias = p_ref[pl.ds(b_off, 1), :]                                # (1, filters)
        # bias + ReLU (Dropout = identity in eval/inference mode)
        return jnp.maximum(acc + bias, 0.0)

    src = xt_ref
    h = None
    for i in range(num_layers):
        h = conv_relu(src, l_outs[i], c_ins[i], offs["conv_w"][i], offs["conv_b"][i])
        if i < num_layers - 1:
            h_scratch[i][...] = h       # keep intermediate VMEM-resident
            src = h_scratch[i]

    # FC1: contract over (position, channel) without flattening sublanes into
    # lanes: y = b1 + sum_l h[l] @ W1_group_l, where W1 rows were pre-grouped per
    # output position (channel-fastest) to match PyTorch's channel-major flatten.
    acc = p_ref[pl.ds(offs["fc1_b"], 1), :].astype(jnp.float32)         # (1, filters)
    for l in range(l_outs[-1]):
        w_l = p_ref[pl.ds(offs["fc1_w"] + l * filters, filters), :]     # (filters, filters)
        acc = acc + jnp.dot(h[l:l + 1, :], w_l, preferred_element_type=jnp.float32)

    # FC2 (w2/b2 columns zero-padded to `filters` lanes inside the packed buffer).
    w2 = p_ref[pl.ds(offs["fc2_w"], filters), :]                        # (filters, filters)
    b2 = p_ref[pl.ds(offs["fc2_b"], 1), :]                              # (1, filters)
    out = jnp.dot(acc, w2, preferred_element_type=jnp.float32) + b2     # (1, filters)
    o_ref[...] = out[:, :num_classes].astype(o_ref.dtype)


# ---------------------------------------------------------------------------
# Model (deterministic synthetic parameters; mirrors MyCNNflex_Regr.__init__)
# ---------------------------------------------------------------------------
def _uniform(key, shape, bound):
    return jax.random.uniform(key, shape, jnp.float32, -bound, bound)


def _round_up(x, m):
    return (x + m - 1) // m * m


class MyCNNflexRegrPallas:
    def __init__(self, input_shape, num_classes=3, kernel_size=7, stride=2,
                 pool_size=1, filters=32, num_layers=3, key=None):
        assert pool_size == 1, "pool_size > 1 (MaxPool1d) path not implemented"
        assert num_classes <= filters, "fc2 columns are packed padded to `filters`"
        self.kernel_size = kernel_size
        self.stride = stride
        self.filters = filters
        self.num_classes = num_classes
        key = jax.random.PRNGKey(0) if key is None else key

        B, C_in, L = input_shape
        self.conv_params = []          # (K, C_in, C_out) tap-major, (1, C_out)
        in_c, l_cur = C_in, L
        l_outs, c_ins = [], []
        for _ in range(num_layers):
            key, kw, kb = jax.random.split(key, 3)
            fan_in = in_c * kernel_size
            bound = 1.0 / jnp.sqrt(jnp.float32(fan_in))
            w = _uniform(kw, (kernel_size, in_c, filters), bound)
            b = _uniform(kb, (1, filters), bound)
            self.conv_params.append((w, b))
            c_ins.append(in_c)
            assert l_cur >= kernel_size, "sequence too short for this conv stack"
            l_out = (l_cur - kernel_size) // stride + 1          # PyTorch floor semantics
            # tap reads stay in-bounds: last read row < l_cur
            assert (kernel_size - 1) + stride * (l_out - 1) < l_cur
            l_outs.append(l_out)
            l_cur = l_out
            in_c = filters
        self.l_outs = tuple(l_outs)
        self.c_ins = tuple(c_ins)
        self.outshape = l_outs[-1]

        fc_in = self.outshape * filters
        key, k1w, k1b, k2w, k2b = jax.random.split(key, 5)
        b1_bound = 1.0 / jnp.sqrt(jnp.float32(fc_in))
        b2_bound = 1.0 / jnp.sqrt(jnp.float32(filters))
        # Stored transposed to (in, out) for y = x @ W + b; w1 rows are in
        # PyTorch's channel-major flatten order (used directly by the reference).
        self.w1 = _uniform(k1w, (fc_in, filters), b1_bound)
        self.b1 = _uniform(k1b, (1, filters), b1_bound)
        self.w2 = _uniform(k2w, (filters, num_classes), b2_bound)
        self.b2 = _uniform(k2b, (1, num_classes), b2_bound)
        # Group w1 rows per output position (channel-fastest) for the in-kernel
        # per-position FC1 contraction.
        w1_grouped = (self.w1.reshape(filters, self.outshape, filters)
                      .transpose(1, 0, 2)
                      .reshape(fc_in, filters))

        self.packed, self.offs = self._pack(w1_grouped)

    # ----------------------------------------------------------- param packing
    def _pack(self, w1_grouped):
        F = self.filters
        segs, cur = [], 0
        offs = {"conv_w": [], "conv_b": []}

        def add(a):
            nonlocal cur
            off = cur
            r = a.shape[0]
            rp = _round_up(r, 8)                       # 8-align each segment
            if rp != r:
                a = jnp.concatenate(
                    [a, jnp.zeros((rp - r, a.shape[1]), a.dtype)], axis=0)
            segs.append(a)
            cur += rp
            return off

        for (w, b) in self.conv_params:
            offs["conv_w"].append(add(w.reshape(-1, F)))   # row = k*c_in + c
            offs["conv_b"].append(add(b))
        offs["fc1_w"] = add(w1_grouped)
        offs["fc1_b"] = add(self.b1)
        w2p = jnp.zeros((F, F), jnp.float32).at[:, :self.num_classes].set(self.w2)
        b2p = jnp.zeros((1, F), jnp.float32).at[:, :self.num_classes].set(self.b2)
        offs["fc2_w"] = add(w2p)
        offs["fc2_b"] = add(b2p)
        return jnp.concatenate(segs, axis=0), offs

    # ------------------------------------------------------------------ Pallas
    def __call__(self, x):
        # x: (B, C_in, L) raw PyTorch NCL layout — no host-side transpose.
        B, C_in, L = x.shape
        F = self.filters
        R = self.packed.shape[0]

        kernel = functools.partial(
            fused_forward_kernel,
            stride=self.stride,
            kernel_size=self.kernel_size,
            l_outs=self.l_outs,
            c_ins=self.c_ins,
            filters=F,
            num_classes=self.num_classes,
            offs=self.offs,
        )

        out = pl.pallas_call(
            kernel,
            out_shape=jax.ShapeDtypeStruct((B, 1, self.num_classes), jnp.float32),
            grid=(B,),
            in_specs=[
                pl.BlockSpec((None, C_in, L), lambda b: (b, 0, 0)),   # one sample/step
                pl.BlockSpec((R, F), lambda b: (0, 0)),               # params resident
            ],
            out_specs=pl.BlockSpec((None, 1, self.num_classes), lambda b: (b, 0, 0)),
            scratch_shapes=[pltpu.VMEM((L, C_in), jnp.float32)]
                + [pltpu.VMEM((self.l_outs[i], F), jnp.float32)
                   for i in range(len(self.l_outs) - 1)],
            compiler_params=pltpu.CompilerParams(
                dimension_semantics=("parallel",)),       # both TCs on v7x
        )(x, self.packed)
        return out.reshape(B, self.num_classes)

    # --------------------------------------------------------- pure-JAX reference
    def reference(self, x):
        for w, b in self.conv_params:
            w_oik = jnp.transpose(w, (2, 1, 0))          # (C_out, C_in, K)
            x = jax.lax.conv_general_dilated(
                x, w_oik, window_strides=(self.stride,), padding="VALID",
                dimension_numbers=("NCH", "OIH", "NCH"))
            x = jnp.maximum(x + b[:, :, None], 0.0)
        x = x.reshape(x.shape[0], -1)                    # channel-major flatten (PyTorch)
        x = x @ self.w1 + self.b1
        x = x @ self.w2 + self.b2
        return x


# ---------------------------------------------------------------------------
if __name__ == "__main__":
    B, C, L = 2, 4, 64
    num_classes = 3

    model = MyCNNflexRegrPallas(
        input_shape=(B, C, L), num_classes=num_classes,
        kernel_size=7, stride=2, pool_size=1, filters=32, num_layers=3,
        key=jax.random.PRNGKey(0),
    )

    x = jax.random.normal(jax.random.PRNGKey(0), (B, C, L), jnp.float32)

    out = model(x)
    out = jax.block_until_ready(out)

    ref = model.reference(x)
    assert out.shape == (B, num_classes), out.shape
    assert jnp.allclose(out, ref, rtol=1e-3, atol=1e-3), (
        "Pallas output mismatch vs JAX reference")

    print("KERNEL_OK")
</pallas_src>

<mosaic_0001>
module attributes {stable_mosaic.version = 11 : i64} {
  func.func @fused_forward_kernel(%arg0: i32, %arg1: memref<1x4x64xf32, #tpu.memory_space<vmem>>, %arg2: memref<648x32xf32, #tpu.memory_space<vmem>>, %arg3: memref<1x1x3xf32, #tpu.memory_space<vmem>>, %arg4: memref<64x4xf32, #tpu.memory_space<vmem>>, %arg5: memref<29x32xf32, #tpu.memory_space<vmem>>, %arg6: memref<12x32xf32, #tpu.memory_space<vmem>>) attributes {dimension_semantics = [#tpu.dimension_semantics<parallel>], iteration_bounds = array<i64: 2>, scalar_prefetch = 0 : i64, scratch_operands = 3 : i64, tpu.core_type = #tpu.core_type<tc>, window_params = [{transform_indices = @transform_0, window_bounds = array<i64: 1, 4, 64>}, {pipeline_mode = #tpu.pipeline_mode<synchronous>, transform_indices = @transform_1, window_bounds = array<i64: 648, 32>}, {transform_indices = @transform_2, window_bounds = array<i64: 1, 1, 3>}]} {
    %c0 = arith.constant 0 : index
    %c0_0 = arith.constant 0 : index
    %c0_1 = arith.constant 0 : index
    %0 = vector.load %arg1[%c0, %c0_0, %c0_1] : memref<1x4x64xf32, #tpu.memory_space<vmem>>, vector<1x4x64xf32>
    %1 = vector.shape_cast %0 : vector<1x4x64xf32> to vector<4x64xf32>
    %2 = tpu.transpose %1, [1, 0] : vector<4x64xf32> -> vector<64x4xf32>
    %c0_2 = arith.constant 0 : index
    %c0_3 = arith.constant 0 : index
    %3 = vector.load %arg4[%c0_2, %c0_3] : memref<64x4xf32, #tpu.memory_space<vmem>>, vector<64x4xf32>
    tpu.vector_store %arg4[%c0_2, %c0_3], %2 {strides = array<i32>} : memref<64x4xf32, #tpu.memory_space<vmem>>, vector<64x4xf32>,
    %c0_4 = arith.constant 0 : index
    %c0_5 = arith.constant 0 : index
    %4 = tpu.strided_load %arg4[%c0_4, %c0_5] {strides = array<i32: 2, 1>} : memref<64x4xf32, #tpu.memory_space<vmem>>, vector<29x4xf32>
    %c0_6 = arith.constant 0 : index
    %c0_7 = arith.constant 0 : index
    %5 = vector.load %arg2[%c0_6, %c0_7] : memref<648x32xf32, #tpu.memory_space<vmem>>, vector<4x32xf32>
    %cst = arith.constant dense<0.000000e+00> : vector<29x32xf32>
    %6 = tpu.matmul %4, %5, %cst {dimension_numbers = #tpu.dot_dimension_numbers<[1], [0], [0], [1], [0, 0, 1, 1], [], []>} : vector<29x4xf32>, vector<4x32xf32>, vector<29x32xf32> -> vector<29x32xf32>
    %c1 = arith.constant 1 : index
    %c0_8 = arith.constant 0 : index
    %7 = tpu.strided_load %arg4[%c1, %c0_8] {strides = array<i32: 2, 1>} : memref<64x4xf32, #tpu.memory_space<vmem>>, vector<29x4xf32>
    %c4 = arith.constant 4 : index
    %c0_9 = arith.constant 0 : index
    %8 = vector.load %arg2[%c4, %c0_9] : memref<648x32xf32, #tpu.memory_space<vmem>>, vector<4x32xf32>
    %cst_10 = arith.constant dense<0.000000e+00> : vector<29x32xf32>
    %9 = tpu.matmul %7, %8, %cst_10 {dimension_numbers = #tpu.dot_dimension_numbers<[1], [0], [0], [1], [0, 0, 1, 1], [], []>} : vector<29x4xf32>, vector<4x32xf32>, vector<29x32xf32> -> vector<29x32xf32>
    %10 = arith.addf %6, %9 : vector<29x32xf32>
    %c2 = arith.constant 2 : index
    %c0_11 = arith.constant 0 : index
    %11 = tpu.strided_load %arg4[%c2, %c0_11] {strides = array<i32: 2, 1>} : memref<64x4xf32, #tpu.memory_space<vmem>>, vector<29x4xf32>
    %c8 = arith.constant 8 : index
    %c0_12 = arith.constant 0 : index
    %12 = vector.load %arg2[%c8, %c0_12] : memref<648x32xf32, #tpu.memory_space<vmem>>, vector<4x32xf32>
    %cst_13 = arith.constant dense<0.000000e+00> : vector<29x32xf32>
    %13 = tpu.matmul %11, %12, %cst_13 {dimension_numbers = #tpu.dot_dimension_numbers<[1], [0], [0], [1], [0, 0, 1, 1], [], []>} : vector<29x4xf32>, vector<4x32xf32>, vector<29x32xf32> -> vector<29x32xf32>
    %14 = arith.addf %10, %13 : vector<29x32xf32>
    %c3 = arith.constant 3 : index
    %c0_14 = arith.constant 0 : index
    %15 = tpu.strided_load %arg4[%c3, %c0_14] {strides = array<i32: 2, 1>} : memref<64x4xf32, #tpu.memory_space<vmem>>, vector<29x4xf32>
    %c12 = arith.constant 12 : index
    %c0_15 = arith.constant 0 : index
    %16 = vector.load %arg2[%c12, %c0_15] : memref<648x32xf32, #tpu.memory_space<vmem>>, vector<4x32xf32>
    %cst_16 = arith.constant dense<0.000000e+00> : vector<29x32xf32>
    %17 = tpu.matmul %15, %16, %cst_16 {dimension_numbers = #tpu.dot_dimension_numbers<[1], [0], [0], [1], [0, 0, 1, 1], [], []>} : vector<29x4xf32>, vector<4x32xf32>, vector<29x32xf32> -> vector<29x32xf32>
    %18 = arith.addf %14, %17 : vector<29x32xf32>
    %c4_17 = arith.constant 4 : index
    %c0_18 = arith.constant 0 : index
    %19 = tpu.strided_load %arg4[%c4_17, %c0_18] {strides = array<i32: 2, 1>} : memref<64x4xf32, #tpu.memory_space<vmem>>, vector<29x4xf32>
    %c16 = arith.constant 16 : index
    %c0_19 = arith.constant 0 : index
    %20 = vector.load %arg2[%c16, %c0_19] : memref<648x32xf32, #tpu.memory_space<vmem>>, vector<4x32xf32>
    %cst_20 = arith.constant dense<0.000000e+00> : vector<29x32xf32>
    %21 = tpu.matmul %19, %20, %cst_20 {dimension_numbers = #tpu.dot_dimension_numbers<[1], [0], [0], [1], [0, 0, 1, 1], [], []>} : vector<29x4xf32>, vector<4x32xf32>, vector<29x32xf32> -> vector<29x32xf32>
    %22 = arith.addf %18, %21 : vector<29x32xf32>
    %c5 = arith.constant 5 : index
    %c0_21 = arith.constant 0 : index
    %23 = tpu.strided_load %arg4[%c5, %c0_21] {strides = array<i32: 2, 1>} : memref<64x4xf32, #tpu.memory_space<vmem>>, vector<29x4xf32>
    %c20 = arith.constant 20 : index
    %c0_22 = arith.constant 0 : index
    %24 = vector.load %arg2[%c20, %c0_22] : memref<648x32xf32, #tpu.memory_space<vmem>>, vector<4x32xf32>
    %cst_23 = arith.constant dense<0.000000e+00> : vector<29x32xf32>
    %25 = tpu.matmul %23, %24, %cst_23 {dimension_numbers = #tpu.dot_dimension_numbers<[1], [0], [0], [1], [0, 0, 1, 1], [], []>} : vector<29x4xf32>, vector<4x32xf32>, vector<29x32xf32> -> vector<29x32xf32>
    %26 = arith.addf %22, %25 : vector<29x32xf32>
    %c6 = arith.constant 6 : index
    %c0_24 = arith.constant 0 : index
    %27 = tpu.strided_load %arg4[%c6, %c0_24] {strides = array<i32: 2, 1>} : memref<64x4xf32, #tpu.memory_space<vmem>>, vector<29x4xf32>
    %c24 = arith.constant 24 : index
    %c0_25 = arith.constant 0 : index
    %28 = vector.load %arg2[%c24, %c0_25] : memref<648x32xf32, #tpu.memory_space<vmem>>, vector<4x32xf32>
    %cst_26 = arith.constant dense<0.000000e+00> : vector<29x32xf32>
    %29 = tpu.matmul %27, %28, %cst_26 {dimension_numbers = #tpu.dot_dimension_numbers<[1], [0], [0], [1], [0, 0, 1, 1], [], []>} : vector<29x4xf32>, vector<4x32xf32>, vector<29x32xf32> -> vector<29x32xf32>
    %30 = arith.addf %26, %29 : vector<29x32xf32>
    %c32 = arith.constant 32 : index
    %c0_27 = arith.constant 0 : index
    %31 = vector.load %arg2[%c32, %c0_27] : memref<648x32xf32, #tpu.memory_space<vmem>>, vector<1x32xf32>
    %32 = vector.broadcast %31 : vector<1x32xf32> to vector<29x32xf32>
    %33 = arith.addf %30, %32 : vector<29x32xf32>
    %cst_28 = arith.constant 0.000000e+00 : f32
    %34 = vector.broadcast %cst_28 : f32 to vector<29x32xf32>
    %35 = arith.maximumf %33, %34 : vector<29x32xf32>
    %c0_29 = arith.constant 0 : index
    %c0_30 = arith.constant 0 : index
    %36 = vector.load %arg5[%c0_29, %c0_30] : memref<29x32xf32, #tpu.memory_space<vmem>>, vector<29x32xf32>
    tpu.vector_store %arg5[%c0_29, %c0_30], %35 {strides = array<i32>} : memref<29x32xf32, #tpu.memory_space<vmem>>, vector<29x32xf32>,
    %c0_31 = arith.constant 0 : index
    %c0_32 = arith.constant 0 : index
    %37 = tpu.strided_load %arg5[%c0_31, %c0_32] {strides = array<i32: 2, 1>} : memref<29x32xf32, #tpu.memory_space<vmem>>, vector<12x32xf32>
    %c40 = arith.constant 40 : index
    %c0_33 = arith.constant 0 : index
    %38 = vector.load %arg2[%c40, %c0_33] : memref<648x32xf32, #tpu.memory_space<vmem>>, vector<32x32xf32>
    %cst_34 = arith.constant dense<0.000000e+00> : vector<12x32xf32>
    %39 = tpu.matmul %37, %38, %cst_34 {dimension_numbers = #tpu.dot_dimension_numbers<[1], [0], [0], [1], [0, 0, 1, 1], [], []>} : vector<12x32xf32>, vector<32x32xf32>, vector<12x32xf32> -> vector<12x32xf32>
    %c1_35 = arith.constant 1 : index
    %c0_36 = arith.constant 0 : index
    %40 = tpu.strided_load %arg5[%c1_35, %c0_36] {strides = array<i32: 2, 1>} : memref<29x32xf32, #tpu.memory_space<vmem>>, vector<12x32xf32>
    %c72 = arith.constant 72 : index
    %c0_37 = arith.constant 0 : index
    %41 = vector.load %arg2[%c72, %c0_37] : memref<648x32xf32, #tpu.memory_space<vmem>>, vector<32x32xf32>
    %cst_38 = arith.constant dense<0.000000e+00> : vector<12x32xf32>
    %42 = tpu.matmul %40, %41, %cst_38 {dimension_numbers = #tpu.dot_dimension_numbers<[1], [0], [0], [1], [0, 0, 1, 1], [], []>} : vector<12x32xf32>, vector<32x32xf32>, vector<12x32xf32> -> vector<12x32xf32>
    %43 = arith.addf %39, %42 : vector<12x32xf32>
    %c2_39 = arith.constant 2 : index
    %c0_40 = arith.constant 0 : index
    %44 = tpu.strided_load %arg5[%c2_39, %c0_40] {strides = array<i32: 2, 1>} : memref<29x32xf32, #tpu.memory_space<vmem>>, vector<12x32xf32>
    %c104 = arith.constant 104 : index
    %c0_41 = arith.constant 0 : index
    %45 = vector.load %arg2[%c104, %c0_41] : memref<648x32xf32, #tpu.memory_space<vmem>>, vector<32x32xf32>
    %cst_42 = arith.constant dense<0.000000e+00> : vector<12x32xf32>
    %46 = tpu.matmul %44, %45, %cst_42 {dimension_numbers = #tpu.dot_dimension_numbers<[1], [0], [0], [1], [0, 0, 1, 1], [], []>} : vector<12x32xf32>, vector<32x32xf32>, vector<12x32xf32> -> vector<12x32xf32>
    %47 = arith.addf %43, %46 : vector<12x32xf32>
    %c3_43 = arith.constant 3 : index
    %c0_44 = arith.constant 0 : index
    %48 = tpu.strided_load %arg5[%c3_43, %c0_44] {strides = array<i32: 2, 1>} : memref<29x32xf32, #tpu.memory_space<vmem>>, vector<12x32xf32>
    %c136 = arith.constant 136 : index
    %c0_45 = arith.constant 0 : index
    %49 = vector.load %arg2[%c136, %c0_45] : memref<648x32xf32, #tpu.memory_space<vmem>>, vector<32x32xf32>
    %cst_46 = arith.constant dense<0.000000e+00> : vector<12x32xf32>
    %50 = tpu.matmul %48, %49, %cst_46 {dimension_numbers = #tpu.dot_dimension_numbers<[1], [0], [0], [1], [0, 0, 1, 1], [], []>} : vector<12x32xf32>, vector<32x32xf32>, vector<12x32xf32> -> vector<12x32xf32>
    %51 = arith.addf %47, %50 : vector<12x32xf32>
    %c4_47 = arith.constant 4 : index
    %c0_48 = arith.constant 0 : index
    %52 = tpu.strided_load %arg5[%c4_47, %c0_48] {strides = array<i32: 2, 1>} : memref<29x32xf32, #tpu.memory_space<vmem>>, vector<12x32xf32>
    %c168 = arith.constant 168 : index
    %c0_49 = arith.constant 0 : index
    %53 = vector.load %arg2[%c168, %c0_49] : memref<648x32xf32, #tpu.memory_space<vmem>>, vector<32x32xf32>
    %cst_50 = arith.constant dense<0.000000e+00> : vector<12x32xf32>
    %54 = tpu.matmul %52, %53, %cst_50 {dimension_numbers = #tpu.dot_dimension_numbers<[1], [0], [0], [1], [0, 0, 1, 1], [], []>} : vector<12x32xf32>, vector<32x32xf32>, vector<12x32xf32> -> vector<12x32xf32>
    %55 = arith.addf %51, %54 : vector<12x32xf32>
    %c5_51 = arith.constant 5 : index
    %c0_52 = arith.constant 0 : index
    %56 = tpu.strided_load %arg5[%c5_51, %c0_52] {strides = array<i32: 2, 1>} : memref<29x32xf32, #tpu.memory_space<vmem>>, vector<12x32xf32>
    %c200 = arith.constant 200 : index
    %c0_53 = arith.constant 0 : index
    %57 = vector.load %arg2[%c200, %c0_53] : memref<648x32xf32, #tpu.memory_space<vmem>>, vector<32x32xf32>
    %cst_54 = arith.constant dense<0.000000e+00> : vector<12x32xf32>
    %58 = tpu.matmul %56, %57, %cst_54 {dimension_numbers = #tpu.dot_dimension_numbers<[1], [0], [0], [1], [0, 0, 1, 1], [], []>} : vector<12x32xf32>, vector<32x32xf32>, vector<12x32xf32> -> vector<12x32xf32>
    %59 = arith.addf %55, %58 : vector<12x32xf32>
    %c6_55 = arith.constant 6 : index
    %c0_56 = arith.constant 0 : index
    %60 = tpu.strided_load %arg5[%c6_55, %c0_56] {strides = array<i32: 2, 1>} : memref<29x32xf32, #tpu.memory_space<vmem>>, vector<12x32xf32>
    %c232 = arith.constant 232 : index
    %c0_57 = arith.constant 0 : index
    %61 = vector.load %arg2[%c232, %c0_57] : memref<648x32xf32, #tpu.memory_space<vmem>>, vector<32x32xf32>
    %cst_58 = arith.constant dense<0.000000e+00> : vector<12x32xf32>
    %62 = tpu.matmul %60, %61, %cst_58 {dimension_numbers = #tpu.dot_dimension_numbers<[1], [0], [0], [1], [0, 0, 1, 1], [], []>} : vector<12x32xf32>, vector<32x32xf32>, vector<12x32xf32> -> vector<12x32xf32>
    %63 = arith.addf %59, %62 : vector<12x32xf32>
    %c264 = arith.constant 264 : index
    %c0_59 = arith.constant 0 : index
    %64 = vector.load %arg2[%c264, %c0_59] : memref<648x32xf32, #tpu.memory_space<vmem>>, vector<1x32xf32>
    %65 = vector.broadcast %64 : vector<1x32xf32> to vector<12x32xf32>
    %66 = arith.addf %63, %65 : vector<12x32xf32>
    %cst_60 = arith.constant 0.000000e+00 : f32
    %67 = vector.broadcast %cst_60 : f32 to vector<12x32xf32>
    %68 = arith.maximumf %66, %67 : vector<12x32xf32>
    %c0_61 = arith.constant 0 : index
    %c0_62 = arith.constant 0 : index
    %69 = vector.load %arg6[%c0_61, %c0_62] : memref<12x32xf32, #tpu.memory_space<vmem>>, vector<12x32xf32>
    tpu.vector_store %arg6[%c0_61, %c0_62], %68 {strides = array<i32>} : memref<12x32xf32, #tpu.memory_space<vmem>>, vector<12x32xf32>,
    %c0_63 = arith.constant 0 : index
    %c0_64 = arith.constant 0 : index
    %70 = tpu.strided_load %arg6[%c0_63, %c0_64] {strides = array<i32: 2, 1>} : memref<12x32xf32, #tpu.memory_space<vmem>>, vector<3x32xf32>
    %c272 = arith.constant 272 : index
    %c0_65 = arith.constant 0 : index
    %71 = vector.load %arg2[%c272, %c0_65] : memref<648x32xf32, #tpu.memory_space<vmem>>, vector<32x32xf32>
    %cst_66 = arith.constant dense<0.000000e+00> : vector<3x32xf32>
    %72 = tpu.matmul %70, %71, %cst_66 {dimension_numbers = #tpu.dot_dimension_numbers<[1], [0], [0], [1], [0, 0, 1, 1], [], []>} : vector<3x32xf32>, vector<32x32xf32>, vector<3x32xf32> -> vector<3x32xf32>
    %c1_67 = arith.constant 1 : index
    %c0_68 = arith.constant 0 : index
    %73 = tpu.strided_load %arg6[%c1_67, %c0_68] {strides = array<i32: 2, 1>} : memref<12x32xf32, #tpu.memory_space<vmem>>, vector<3x32xf32>
    %c304 = arith.constant 304 : index
    %c0_69 = arith.constant 0 : index
    %74 = vector.load %arg2[%c304, %c0_69] : memref<648x32xf32, #tpu.memory_space<vmem>>, vector<32x32xf32>
    %cst_70 = arith.constant dense<0.000000e+00> : vector<3x32xf32>
    %75 = tpu.matmul %73, %74, %cst_70 {dimension_numbers = #tpu.dot_dimension_numbers<[1], [0], [0], [1], [0, 0, 1, 1], [], []>} : vector<3x32xf32>, vector<32x32xf32>, vector<3x32xf32> -> vector<3x32xf32>
    %76 = arith.addf %72, %75 : vector<3x32xf32>
    %c2_71 = arith.constant 2 : index
    %c0_72 = arith.constant 0 : index
    %77 = tpu.strided_load %arg6[%c2_71, %c0_72] {strides = array<i32: 2, 1>} : memref<12x32xf32, #tpu.memory_space<vmem>>, vector<3x32xf32>
    %c336 = arith.constant 336 : index
    %c0_73 = arith.constant 0 : index
    %78 = vector.load %arg2[%c336, %c0_73] : memref<648x32xf32, #tpu.memory_space<vmem>>, vector<32x32xf32>
    %cst_74 = arith.constant dense<0.000000e+00> : vector<3x32xf32>
    %79 = tpu.matmul %77, %78, %cst_74 {dimension_numbers = #tpu.dot_dimension_numbers<[1], [0], [0], [1], [0, 0, 1, 1], [], []>} : vector<3x32xf32>, vector<32x32xf32>, vector<3x32xf32> -> vector<3x32xf32>
    %80 = arith.addf %76, %79 : vector<3x32xf32>
    %c3_75 = arith.constant 3 : index
    %c0_76 = arith.constant 0 : index
    %81 = tpu.strided_load %arg6[%c3_75, %c0_76] {strides = array<i32: 2, 1>} : memref<12x32xf32, #tpu.memory_space<vmem>>, vector<3x32xf32>
    %c368 = arith.constant 368 : index
    %c0_77 = arith.constant 0 : index
    %82 = vector.load %arg2[%c368, %c0_77] : memref<648x32xf32, #tpu.memory_space<vmem>>, vector<32x32xf32>
    %cst_78 = arith.constant dense<0.000000e+00> : vector<3x32xf32>
    %83 = tpu.matmul %81, %82, %cst_78 {dimension_numbers = #tpu.dot_dimension_numbers<[1], [0], [0], [1], [0, 0, 1, 1], [], []>} : vector<3x32xf32>, vector<32x32xf32>, vector<3x32xf32> -> vector<3x32xf32>
    %84 = arith.addf %80, %83 : vector<3x32xf32>
    %c4_79 = arith.constant 4 : index
    %c0_80 = arith.constant 0 : index
    %85 = tpu.strided_load %arg6[%c4_79, %c0_80] {strides = array<i32: 2, 1>} : memref<12x32xf32, #tpu.memory_space<vmem>>, vector<3x32xf32>
    %c400 = arith.constant 400 : index
    %c0_81 = arith.constant 0 : index
    %86 = vector.load %arg2[%c400, %c0_81] : memref<648x32xf32, #tpu.memory_space<vmem>>, vector<32x32xf32>
    %cst_82 = arith.constant dense<0.000000e+00> : vector<3x32xf32>
    %87 = tpu.matmul %85, %86, %cst_82 {dimension_numbers = #tpu.dot_dimension_numbers<[1], [0], [0], [1], [0, 0, 1, 1], [], []>} : vector<3x32xf32>, vector<32x32xf32>, vector<3x32xf32> -> vector<3x32xf32>
    %88 = arith.addf %84, %87 : vector<3x32xf32>
    %c5_83 = arith.constant 5 : index
    %c0_84 = arith.constant 0 : index
    %89 = tpu.strided_load %arg6[%c5_83, %c0_84] {strides = array<i32: 2, 1>} : memref<12x32xf32, #tpu.memory_space<vmem>>, vector<3x32xf32>
    %c432 = arith.constant 432 : index
    %c0_85 = arith.constant 0 : index
    %90 = vector.load %arg2[%c432, %c0_85] : memref<648x32xf32, #tpu.memory_space<vmem>>, vector<32x32xf32>
    %cst_86 = arith.constant dense<0.000000e+00> : vector<3x32xf32>
    %91 = tpu.matmul %89, %90, %cst_86 {dimension_numbers = #tpu.dot_dimension_numbers<[1], [0], [0], [1], [0, 0, 1, 1], [], []>} : vector<3x32xf32>, vector<32x32xf32>, vector<3x32xf32> -> vector<3x32xf32>
    %92 = arith.addf %88, %91 : vector<3x32xf32>
    %c6_87 = arith.constant 6 : index
    %c0_88 = arith.constant 0 : index
    %93 = tpu.strided_load %arg6[%c6_87, %c0_88] {strides = array<i32: 2, 1>} : memref<12x32xf32, #tpu.memory_space<vmem>>, vector<3x32xf32>
    %c464 = arith.constant 464 : index
    %c0_89 = arith.constant 0 : index
    %94 = vector.load %arg2[%c464, %c0_89] : memref<648x32xf32, #tpu.memory_space<vmem>>, vector<32x32xf32>
    %cst_90 = arith.constant dense<0.000000e+00> : vector<3x32xf32>
    %95 = tpu.matmul %93, %94, %cst_90 {dimension_numbers = #tpu.dot_dimension_numbers<[1], [0], [0], [1], [0, 0, 1, 1], [], []>} : vector<3x32xf32>, vector<32x32xf32>, vector<3x32xf32> -> vector<3x32xf32>
    %96 = arith.addf %92, %95 : vector<3x32xf32>
    %c496 = arith.constant 496 : index
    %c0_91 = arith.constant 0 : index
    %97 = vector.load %arg2[%c496, %c0_91] : memref<648x32xf32, #tpu.memory_space<vmem>>, vector<1x32xf32>
    %98 = vector.broadcast %97 : vector<1x32xf32> to vector<3x32xf32>
    %99 = arith.addf %96, %98 : vector<3x32xf32>
    %cst_92 = arith.constant 0.000000e+00 : f32
    %100 = vector.broadcast %cst_92 : f32 to vector<3x32xf32>
    %101 = arith.maximumf %99, %100 : vector<3x32xf32>
    %c600 = arith.constant 600 : index
    %c0_93 = arith.constant 0 : index
    %102 = vector.load %arg2[%c600, %c0_93] : memref<648x32xf32, #tpu.memory_space<vmem>>, vector<1x32xf32>
    %c504 = arith.constant 504 : index
    %c0_94 = arith.constant 0 : index
    %103 = vector.load %arg2[%c504, %c0_94] : memref<648x32xf32, #tpu.memory_space<vmem>>, vector<32x32xf32>
    %104 = vector.extract_strided_slice %101 {offsets = [0, 0], sizes = [1, 32], strides = [1, 1]} : vector<3x32xf32> to vector<1x32xf32>
    %cst_95 = arith.constant dense<0.000000e+00> : vector<1x32xf32>
    %105 = tpu.matmul %104, %103, %cst_95 {dimension_numbers = #tpu.dot_dimension_numbers<[1], [0], [0], [1], [0, 0, 1, 1], [], []>} : vector<1x32xf32>, vector<32x32xf32>, vector<1x32xf32> -> vector<1x32xf32>
    %106 = arith.addf %102, %105 : vector<1x32xf32>
    %c536 = arith.constant 536 : index
    %c0_96 = arith.constant 0 : index
    %107 = vector.load %arg2[%c536, %c0_96] : memref<648x32xf32, #tpu.memory_space<vmem>>, vector<32x32xf32>
    %108 = vector.extract_strided_slice %101 {offsets = [1, 0], sizes = [1, 32], strides = [1, 1]} : vector<3x32xf32> to vector<1x32xf32>
    %cst_97 = arith.constant dense<0.000000e+00> : vector<1x32xf32>
    %109 = tpu.matmul %108, %107, %cst_97 {dimension_numbers = #tpu.dot_dimension_numbers<[1], [0], [0], [1], [0, 0, 1, 1], [], []>} : vector<1x32xf32>, vector<32x32xf32>, vector<1x32xf32> -> vector<1x32xf32>
    %110 = arith.addf %106, %109 : vector<1x32xf32>
    %c568 = arith.constant 568 : index
    %c0_98 = arith.constant 0 : index
    %111 = vector.load %arg2[%c568, %c0_98] : memref<648x32xf32, #tpu.memory_space<vmem>>, vector<32x32xf32>
    %112 = vector.extract_strided_slice %101 {offsets = [2, 0], sizes = [1, 32], strides = [1, 1]} : vector<3x32xf32> to vector<1x32xf32>
    %cst_99 = arith.constant dense<0.000000e+00> : vector<1x32xf32>
    %113 = tpu.matmul %112, %111, %cst_99 {dimension_numbers = #tpu.dot_dimension_numbers<[1], [0], [0], [1], [0, 0, 1, 1], [], []>} : vector<1x32xf32>, vector<32x32xf32>, vector<1x32xf32> -> vector<1x32xf32>
    %114 = arith.addf %110, %113 : vector<1x32xf32>
    %c608 = arith.constant 608 : index
    %c0_100 = arith.constant 0 : index
    %115 = vector.load %arg2[%c608, %c0_100] : memref<648x32xf32, #tpu.memory_space<vmem>>, vector<32x32xf32>
    %c640 = arith.constant 640 : index
    %c0_101 = arith.constant 0 : index
    %116 = vector.load %arg2[%c640, %c0_101] : memref<648x32xf32, #tpu.memory_space<vmem>>, vector<1x32xf32>
    %cst_102 = arith.constant dense<0.000000e+00> : vector<1x32xf32>
    %117 = tpu.matmul %114, %115, %cst_102 {dimension_numbers = #tpu.dot_dimension_numbers<[1], [0], [0], [1], [0, 0, 1, 1], [], []>} : vector<1x32xf32>, vector<32x32xf32>, vector<1x32xf32> -> vector<1x32xf32>
    %118 = arith.addf %117, %116 : vector<1x32xf32>
    %119 = vector.extract_strided_slice %118 {offsets = [0, 0], sizes = [1, 3], strides = [1, 1]} : vector<1x32xf32> to vector<1x3xf32>
    %c0_103 = arith.constant 0 : index
    %c0_104 = arith.constant 0 : index
    %c0_105 = arith.constant 0 : index
    %120 = vector.load %arg3[%c0_103, %c0_104, %c0_105] : memref<1x1x3xf32, #tpu.memory_space<vmem>>, vector<1x1x3xf32>
    %121 = vector.shape_cast %120 : vector<1x1x3xf32> to vector<1x3xf32>
    %122 = vector.shape_cast %119 : vector<1x3xf32> to vector<1x1x3xf32>
    tpu.vector_store %arg3[%c0_103, %c0_104, %c0_105], %122 {strides = array<i32>} : memref<1x1x3xf32, #tpu.memory_space<vmem>>, vector<1x1x3xf32>,
    return
  }
  func.func @transform_0(%arg0: i32) -> (i32, i32, i32) {
    %c0_i32 = arith.constant 0 : i32
    %c0_i32_0 = arith.constant 0 : i32
    %c0_i32_1 = arith.constant 0 : i32
    return %arg0, %c0_i32, %c0_i32_0 : i32, i32, i32
  }
  func.func @transform_1(%arg0: i32) -> (i32, i32) {
    %c0_i32 = arith.constant 0 : i32
    %c0_i32_0 = arith.constant 0 : i32
    %c0_i32_1 = arith.constant 0 : i32
    return %c0_i32, %c0_i32_0 : i32, i32
  }
  func.func @transform_2(%arg0: i32) -> (i32, i32, i32) {
    %c0_i32 = arith.constant 0 : i32
    %c0_i32_0 = arith.constant 0 : i32
    %c0_i32_1 = arith.constant 0 : i32
    return %arg0, %c0_i32, %c0_i32_0 : i32, i32, i32
  }
}

</mosaic_0001>

<llo_original>
// kernel: tpu_custom_call.1
$region0: #{tpu_custom_call.1}
  #allocation0 [shape = 'u32[]', space=smem, size = 0x4, offset = 0x4, fixed_abs, tag = 'smem constant byte address 0x4 - core index']
  #allocation1 [shape = 'u32[144,128]{1,0:T(1,128)}', space=vmem, size = 0x12000, scoped, tag = 'internal scratch']
  #allocation2 [shape = 'f32[64,4]{1,0:T(8,128)}', space=vmem, size = 0x8000, scoped, tag = 'scratch operand']
  #allocation3 [shape = 'f32[29,32]{1,0:T(8,128)}', space=vmem, size = 0x4000, scoped, tag = 'scratch operand']
  #allocation4 [shape = 'f32[12,32]{1,0:T(8,128)}', space=vmem, size = 0x2000, scoped, tag = 'scratch operand']
  %s0 = inlined_call_operand.vmem [shape: f32[2,4,64], index: 0, kind: input, shape index: {}]
  %s1 = inlined_call_operand.vmem [shape: f32[648,32], index: 1, kind: input, shape index: {}]
  %s2 = inlined_call_operand.hbm [shape: f32[2,1,3], index: 2, kind: output, shape index: {}]
  %s3 = sld [smem:[#allocation0]]
  $region41: #{tpu_custom_call.1} parent=0
    _
  %s5 = ssub.s32 1, %s3
  %s6 = scalar_select 0, %s5, %s3
  $region1: #{tpu_custom_call.1} parent=0
    #allocation5 [shape = 'u8[1024]{0}', space=vmem, size = 0x400, scoped, tag = 'output window, operand 0']
    #allocation6 [shape = 's32[2]{0}', space=sflag, size = 0x8, scoped, tag = 'scoped memory for tpu_custom_call.1']
    %7 = vsyncpa [#allocation6], 0
    %s8 = scalar_lea.sflag [#allocation6], 1
    %9 = vsyncpa %s8, 0
    loop: start=0, step=1, limit=4
    $region2: #{tpu_custom_call.1} parent=1 // loop_pre_header
      _
    $region3: #{tpu_custom_call.1} parent=1 // loop_header
      %s11 = sphi 0, %s15
      %p12 = scmp.ge.s32.totalorder %s11, 4
      %s21 = sphi 0, %s23
      %s24 = sphi 0, %s21
      %s25 = sphi 0, %s24
      %s41 = sphi 0, %s25
      %s45 = sphi 0, %s45
      %s47 = sphi 0, %s45
      %s48 = sphi 0, %s47
      %s62 = sphi 0, %s48
      %s68 = sphi 0, %s70
      %s71 = sphi 0, %s68
      %s72 = sphi 0, %s71
      %s88 = sphi 0, %s72
    $region4: #{tpu_custom_call.1} parent=1 // loop_header_branch
      %14 = sbr.rel (%p12) target = $region8
    $region5: #{tpu_custom_call.1} parent=1 // loop_body
      %s16 = ssub.s32 %s11, 1
      %s17 = ssub.s32 %s11, 2
      %s18 = sadd.s32 %s11, 1
      %s19 = ssub.s32 %s11, %s18
      %p20 = scmp.eq.s32.totalorder %s19, 0
      %s22 = sadd.s32 %s21, 1
      %s23 = scalar_select %p20, %s21, %s22
      %p26 = pneg %p20
      %p27 = scmp.eq.s32.totalorder %s11, 1
      %p28 = por %p26, %p27
      %p29 = scmp.ne.s32.totalorder %s21, %s24
      %p30 = scmp.eq.s32.totalorder %s11, 0
      %p31 = por %p29, %p30
      %p32 = scmp.ne.s32.totalorder %s21, %s24
      %p33 = scmp.eq.s32.totalorder %s16, 1
      %p34 = por %p32, %p33
      %p35 = scmp.ne.s32.totalorder %s24, %s25
      %p36 = scmp.eq.s32.totalorder %s16, 0
      %p37 = por %p35, %p36
      %p38 = scmp.ne.s32.totalorder %s24, %s25
      %p39 = scmp.eq.s32.totalorder %s17, 1
      %p40 = por %p38, %p39
      %p42 = scmp.ne.s32.totalorder %s25, %s41
      %p43 = scmp.eq.s32.totalorder %s17, 0
      %p44 = por %p42, %p43
      %s46 = sadd.s32 %s45, 1
      %p49 = scmp.eq.s32.totalorder %s11, 1
      %p50 = scmp.ne.s32.totalorder %s45, %s47
      %p51 = scmp.eq.s32.totalorder %s11, 0
      %p52 = por %p50, %p51
      %p53 = scmp.ne.s32.totalorder %s45, %s47
      %p54 = scmp.eq.s32.totalorder %s16, 1
      %p55 = por %p53, %p54
      %p56 = scmp.ne.s32.totalorder %s47, %s48
      %p57 = scmp.eq.s32.totalorder %s16, 0
      %p58 = por %p56, %p57
      %p59 = scmp.ne.s32.totalorder %s47, %s48
      %p60 = scmp.eq.s32.totalorder %s17, 1
      %p61 = por %p59, %p60
      %p63 = scmp.ne.s32.totalorder %s48, %s62
      %p64 = scmp.eq.s32.totalorder %s17, 0
      %p65 = por %p63, %p64
      %s66 = ssub.s32 %s11, %s18
      %p67 = scmp.eq.s32.totalorder %s66, 0
      %s69 = sadd.s32 %s68, 1
      %s70 = scalar_select %p67, %s68, %s69
      %p73 = pneg %p67
      %p74 = scmp.eq.s32.totalorder %s11, 1
      %p75 = por %p73, %p74
      %p76 = scmp.ne.s32.totalorder %s68, %s71
      %p77 = scmp.eq.s32.totalorder %s11, 0
      %p78 = por %p76, %p77
      %p79 = scmp.ne.s32.totalorder %s68, %s71
      %p80 = scmp.eq.s32.totalorder %s16, 1
      %p81 = por %p79, %p80
      %p82 = scmp.ne.s32.totalorder %s71, %s72
      %p83 = scmp.eq.s32.totalorder %s16, 0
      %p84 = por %p82, %p83
      %p85 = scmp.ne.s32.totalorder %s71, %s72
      %p86 = scmp.eq.s32.totalorder %s17, 1
      %p87 = por %p85, %p86
      %p89 = scmp.ne.s32.totalorder %s72, %s88
      %p90 = scmp.eq.s32.totalorder %s17, 0
      %p91 = por %p89, %p90
      %p92 = scmp.le.s32.totalorder 1, %s11
      %p93 = scmp.lt.s32.totalorder %s11, 3
      %p94 = pnand %p92, %p93
      %p95 = pneg %p94
      // Predicated region
      $region9: #{tpu_custom_call.1} parent=5 // pred_check
        _
      $region10: #{tpu_custom_call.1} parent=5 // pred_check_branch
        %97 = sbr.rel (%p94) target = $region12
      $region11: #{tpu_custom_call.1} parent=5 // pred_region
        %s98 = ssub.s32 %s11, 1
        // Predicated region
        $region13: #{tpu_custom_call.1} parent=11 // pred_check
          %p99 = pneg %p58
        $region14: #{tpu_custom_call.1} parent=11 // pred_check_branch
          %101 = sbr.rel (%p99) target = $region16
        $region15: #{tpu_custom_call.1} parent=11 // pred_region
          _
        $region16: #{tpu_custom_call.1} parent=11 // pred_fallthru
          _
      $region12: #{tpu_custom_call.1} parent=5 // pred_fallthru
        _
      %p102 = scmp.lt.s32.totalorder %s11, 2
      // Predicated region
      $region17: #{tpu_custom_call.1} parent=5 // pred_check
        %p103 = pneg %p102
      $region18: #{tpu_custom_call.1} parent=5 // pred_check_branch
        %105 = sbr.rel (%p103) target = $region20
      $region19: #{tpu_custom_call.1} parent=5 // pred_region
        // Predicated region
        $region21: #{tpu_custom_call.1} parent=19 // pred_check
          %p106 = pneg %p31
        $region22: #{tpu_custom_call.1} parent=19 // pred_check_branch
          %108 = sbr.rel (%p106) target = $region24
        $region23: #{tpu_custom_call.1} parent=19 // pred_region
          %p109 = scmp.lt.s32.totalorder %s11, 1
          %s110 = scalar_select %p109, %s11, 1
          %s111 = smul.addr %s110, 4
          %s112 = scalar_lea.vmem %s0, %s111
        $region24: #{tpu_custom_call.1} parent=19 // pred_fallthru
          _
      $region20: #{tpu_custom_call.1} parent=5 // pred_fallthru
        _
      %p113 = scmp.le.s32.totalorder 1, %s11
      %p114 = scmp.lt.s32.totalorder %s11, 3
      %p115 = pnand %p113, %p114
      %p116 = pneg %p115
      // Predicated region
      $region25: #{tpu_custom_call.1} parent=5 // pred_check
        _
      $region26: #{tpu_custom_call.1} parent=5 // pred_check_branch
        %118 = sbr.rel (%p115) target = $region28
      $region27: #{tpu_custom_call.1} parent=5 // pred_region
        %s119 = ssub.s32 %s11, 1
        %p120 = scmp.lt.s32.totalorder %s16, 1
        %s121 = scalar_select %p120, %s16, 1
        %s122 = smul.addr %s121, 4
        %s123 = scalar_lea.vmem %s0, %s122
        %p124 = pneg %p37
        %p125 = pneg %p34
        %p126 = pneg %p58
        %p127 = pneg %p55
        %p128 = pneg %p84
        %p129 = pneg %p81
        %s130 = sand.u32 %s71, 1
        %s131 = scalar_lea.sflag [#allocation6], %s130
        %s132 = sand.u32 %s71, 1
        %s133 = scalar_lea.vmem [#allocation5], %s132
        %p134 = scmp.lt.s32.totalorder %s16, 1
        %s135 = scalar_select %p134, %s16, 1
        %s136 = smul.addr %s135, 4
        %s137 = scalar_lea.vmem %s0, %s136
        %v138 = vld [vmem:[%s137] sm:$0xf]
        %139 = vxpose.xlu0.b32.start [1/16] %v138, 128
        %140 = vxpose.xlu0.b32.cont [2/16] 0.0, 128
        %141 = vxpose.xlu0.b32.cont [3/16] 0.0, 128
        %142 = vxpose.xlu0.b32.cont [4/16] 0.0, 128
        %143 = vxpose.xlu0.b32.cont [5/16] 0.0, 128
        %144 = vxpose.xlu0.b32.cont [6/16] 0.0, 128
        %145 = vxpose.xlu0.b32.cont [7/16] 0.0, 128
        %146 = vxpose.xlu0.b32.cont [8/16] 0.0, 128
        %147 = vxpose.xlu0.b32.cont [9/16] 0.0, 128
        %148 = vxpose.xlu0.b32.cont [10/16] 0.0, 128
        %149 = vxpose.xlu0.b32.cont [11/16] 0.0, 128
        %150 = vxpose.xlu0.b32.cont [12/16] 0.0, 128
        %151 = vxpose.xlu0.b32.cont [13/16] 0.0, 128
        %152 = vxpose.xlu0.b32.cont [14/16] 0.0, 128
        %153 = vxpose.xlu0.b32.cont [15/16] 0.0, 128
        %154 = vxpose.xlu0.b32.end [16/16] 0.0, 128
        %v155 = vpop.trf.xlu0
        %v156 = vpop.trf.xlu0
        %v157 = vpop.trf.xlu0
        %v158 = vpop.trf.xlu0
        %v159 = vpop.trf.xlu0
        %v160 = vpop.trf.xlu0
        %v161 = vpop.trf.xlu0
        %v162 = vpop.trf.xlu0
        %v163 = vpop.trf.xlu0
        %v164 = vpop.trf.xlu0
        %v165 = vpop.trf.xlu0
        %v166 = vpop.trf.xlu0
        %v167 = vpop.trf.xlu0
        %v168 = vpop.trf.xlu0
        %v169 = vpop.trf.xlu0
        %v170 = vpop.trf.xlu0
        %vm171 = vcmask 31744
        %172 = vst.msk [vmem:[#allocation2] sm:$0xff] %vm171, %v155
        %173 = vst.msk [vmem:[#allocation2 + $0x8] sm:$0xff] %vm171, %v156
        %174 = vst.msk [vmem:[#allocation2 + $0x10] sm:$0xff] %vm171, %v157
        %175 = vst.msk [vmem:[#allocation2 + $0x18] sm:$0xff] %vm171, %v158
        %176 = vst.msk [vmem:[#allocation2 + $0x20] sm:$0xff] %vm171, %v159
        %177 = vst.msk [vmem:[#allocation2 + $0x28] sm:$0xff] %vm171, %v160
        %178 = vst.msk [vmem:[#allocation2 + $0x30] sm:$0xff] %vm171, %v161
        %179 = vst.msk [vmem:[#allocation2 + $0x38] sm:$0xff] %vm171, %v162
        %v180 = vld [vmem:[#allocation2] ss:$2 sm:$0xff]
        %s181 = scalar_lea.vmem [#allocation2], 16
        %v182 = vld [vmem:[%s181] ss:$2 sm:$0xff]
        %s183 = scalar_lea.vmem [#allocation2], 32
        %v184 = vld [vmem:[%s183] ss:$2 sm:$0xff]
        %s185 = scalar_lea.vmem [#allocation2], 48
        %v186 = vld [vmem:[%s185] ss:$2 sm:$0x1f]
        %v187 = vld [vmem:[%s1] sm:$0xf]
        %s188 = scalar_lea.vmem [#allocation2], 1
        %v189 = vld [vmem:[%s188] ss:$2 sm:$0xff]
        %s190 = scalar_lea.vmem [#allocation2], 17
        %v191 = vld [vmem:[%s190] ss:$2 sm:$0xff]
        %s192 = scalar_lea.vmem [#allocation2], 33
        %v193 = vld [vmem:[%s192] ss:$2 sm:$0xff]
        %s194 = scalar_lea.vmem [#allocation2], 49
        %v195 = vld [vmem:[%s194] ss:$2 sm:$0x1f]
        %v196 = vld [vmem:[%s1 + $0x4] sm:$0xf]
        %v198 = vsel %vm171, %v189, 0
        %v201 = vsel %vm171, %v191, 0
        %v204 = vsel %vm171, %v193, 0
        %v207 = vsel %vm171, %v195, 0
        %vm209 = vcmask 1043456
        %v211 = vsel %vm209, %v196, 0
        %213 = vmatprep.subr.mxu0 0.0
        %214 = vmatpush1.msra.mxu0 0.0
        %215 = vmatprep.subr.mxu0 0.0
        %216 = vmatpush1.msra.mxu0 0.0
        %217 = vmatprep.subr.mxu0 0.0
        %218 = vmatpush1.msra.mxu0 0.0
        %219 = vmatprep.subr.mxu0 0.0
        %220 = vmatpush1.msra.mxu0 0.0
        %221 = vmatprep.subr.mxu0 0.0
        %222 = vmatpush1.msra.mxu0 0.0
        %223 = vmatprep.subr.mxu0 0.0
        %224 = vmatpush1.msra.mxu0 0.0
        %225 = vmatprep.subr.mxu0 0.0
        %226 = vmatpush1.msra.mxu0 0.0
        %227 = vmatprep.subr.mxu0 0.0
        %228 = vmatpush1.msra.mxu0 0.0
        %229 = vmatprep.subr.mxu0 0.0
        %230 = vmatpush1.msra.mxu0 0.0
        %231 = vmatprep.subr.mxu0 0.0
        %232 = vmatpush1.msra.mxu0 0.0
        %233 = vmatprep.subr.mxu0 0.0
        %234 = vmatpush1.msra.mxu0 0.0
        %235 = vmatprep.subr.mxu0 0.0
        %236 = vmatpush1.msra.mxu0 0.0
        %237 = vmatprep.subr.mxu0 0.0
        %238 = vmatpush1.msra.mxu0 0.0
        %239 = vmatprep.subr.mxu0 0.0
        %240 = vmatpush1.msra.mxu0 0.0
        %241 = vmatprep.subr.mxu0 0.0
        %242 = vmatpush1.msra.mxu0 0.0
        %243 = vmatprep.subr.mxu0 0.0
        %244 = vmatpush1.msra.mxu0 %v211
        %245 = vmatprep.subr.mxu0 0.0
        %246 = vmatpush2.msra.mxu0 0.0
        %247 = vmatprep.subr.mxu0 0.0
        %248 = vmatpush2.msra.mxu0 0.0
        %249 = vmatprep.subr.mxu0 0.0
        %250 = vmatpush2.msra.mxu0 0.0
        %251 = vmatprep.subr.mxu0 0.0
        %252 = vmatpush2.msra.mxu0 0.0
        %253 = vmatprep.subr.mxu0 0.0
        %254 = vmatpush2.msra.mxu0 0.0
        %255 = vmatprep.subr.mxu0 0.0
        %256 = vmatpush2.msra.mxu0 0.0
        %257 = vmatprep.subr.mxu0 0.0
        %258 = vmatpush2.msra.mxu0 0.0
        %259 = vmatprep.subr.mxu0 0.0
        %260 = vmatpush2.msra.mxu0 0.0
        %261 = vmatprep.subr.mxu0 0.0
        %262 = vmatpush2.msra.mxu0 0.0
        %263 = vmatprep.subr.mxu0 0.0
        %264 = vmatpush2.msra.mxu0 0.0
        %265 = vmatprep.subr.mxu0 0.0
        %266 = vmatpush2.msra.mxu0 0.0
        %267 = vmatprep.subr.mxu0 0.0
        %268 = vmatpush2.msra.mxu0 0.0
        %269 = vmatprep.subr.mxu0 0.0
        %270 = vmatpush2.msra.mxu0 0.0
        %271 = vmatprep.subr.mxu0 0.0
        %272 = vmatpush2.msra.mxu0 0.0
        %273 = vmatprep.subr.mxu0 0.0
        %274 = vmatpush2.msra.mxu0 0.0
        %275 = vmatprep.subr.mxu0 0.0
        %276 = vmatpush2.msra.mxu0 0.0
        %277 = vmatprep.mubr.f32.mxu0 0.0
        %278 = vmatmul.mubr.f32.gmra.mxu0 %v198
        %v279 = vpop.f32.mrf.mxu0
        %v280 = vadd.f32 0.0, %v279
        %v281 = vpop.f32.mrf.mxu0
        %282 = vmatprep.mubr.f32.mxu0 0.0
        %283 = vmatmul.mubr.f32.gmra.mxu0 %v201
        %v284 = vpop.f32.mrf.mxu0
        %v285 = vadd.f32 0.0, %v284
        %v286 = vpop.f32.mrf.mxu0
        %287 = vmatprep.mubr.f32.mxu0 0.0
        %288 = vmatmul.mubr.f32.gmra.mxu0 %v204
        %v289 = vpop.f32.mrf.mxu0
        %v290 = vadd.f32 0.0, %v289
        %v291 = vpop.f32.mrf.mxu0
        %292 = vmatprep.mubr.f32.mxu0 0.0
        %293 = vmatmul.mubr.f32.gmra.mxu0 %v207
        %v294 = vpop.f32.mrf.mxu0
        %v295 = vadd.f32 0.0, %v294
        %v296 = vpop.f32.mrf.mxu0
        %297 = vdwg.mxu0
        %v299 = vsel %vm171, %v180, 0
        %v302 = vsel %vm171, %v182, 0
        %v305 = vsel %vm171, %v184, 0
        %v308 = vsel %vm171, %v186, 0
        %v311 = vsel %vm209, %v187, 0
        %313 = vmatprep.subr.mxu0 0.0
        %314 = vmatpush1.msra.mxu0 0.0
        %315 = vmatprep.subr.mxu0 0.0
        %316 = vmatpush1.msra.mxu0 0.0
        %317 = vmatprep.subr.mxu0 0.0
        %318 = vmatpush1.msra.mxu0 0.0
        %319 = vmatprep.subr.mxu0 0.0
        %320 = vmatpush1.msra.mxu0 0.0
        %321 = vmatprep.subr.mxu0 0.0
        %322 = vmatpush1.msra.mxu0 0.0
        %323 = vmatprep.subr.mxu0 0.0
        %324 = vmatpush1.msra.mxu0 0.0
        %325 = vmatprep.subr.mxu0 0.0
        %326 = vmatpush1.msra.mxu0 0.0
        %327 = vmatprep.subr.mxu0 0.0
        %328 = vmatpush1.msra.mxu0 0.0
        %329 = vmatprep.subr.mxu0 0.0
        %330 = vmatpush1.msra.mxu0 0.0
        %331 = vmatprep.subr.mxu0 0.0
        %332 = vmatpush1.msra.mxu0 0.0
        %333 = vmatprep.subr.mxu0 0.0
        %334 = vmatpush1.msra.mxu0 0.0
        %335 = vmatprep.subr.mxu0 0.0
        %336 = vmatpush1.msra.mxu0 0.0
        %337 = vmatprep.subr.mxu0 0.0
        %338 = vmatpush1.msra.mxu0 0.0
        %339 = vmatprep.subr.mxu0 0.0
        %340 = vmatpush1.msra.mxu0 0.0
        %341 = vmatprep.subr.mxu0 0.0
        %342 = vmatpush1.msra.mxu0 0.0
        %343 = vmatprep.subr.mxu0 0.0
        %344 = vmatpush1.msra.mxu0 %v311
        %345 = vmatprep.subr.mxu0 0.0
        %346 = vmatpush2.msra.mxu0 0.0
        %347 = vmatprep.subr.mxu0 0.0
        %348 = vmatpush2.msra.mxu0 0.0
        %349 = vmatprep.subr.mxu0 0.0
        %350 = vmatpush2.msra.mxu0 0.0
        %351 = vmatprep.subr.mxu0 0.0
        %352 = vmatpush2.msra.mxu0 0.0
        %353 = vmatprep.subr.mxu0 0.0
        %354 = vmatpush2.msra.mxu0 0.0
        %355 = vmatprep.subr.mxu0 0.0
        %356 = vmatpush2.msra.mxu0 0.0
        %357 = vmatprep.subr.mxu0 0.0
        %358 = vmatpush2.msra.mxu0 0.0
        %359 = vmatprep.subr.mxu0 0.0
        %360 = vmatpush2.msra.mxu0 0.0
        %361 = vmatprep.subr.mxu0 0.0
        %362 = vmatpush2.msra.mxu0 0.0
        %363 = vmatprep.subr.mxu0 0.0
        %364 = vmatpush2.msra.mxu0 0.0
        %365 = vmatprep.subr.mxu0 0.0
        %366 = vmatpush2.msra.mxu0 0.0
        %367 = vmatprep.subr.mxu0 0.0
        %368 = vmatpush2.msra.mxu0 0.0
        %369 = vmatprep.subr.mxu0 0.0
        %370 = vmatpush2.msra.mxu0 0.0
        %371 = vmatprep.subr.mxu0 0.0
        %372 = vmatpush2.msra.mxu0 0.0
        %373 = vmatprep.subr.mxu0 0.0
        %374 = vmatpush2.msra.mxu0 0.0
        %375 = vmatprep.subr.mxu0 0.0
        %376 = vmatpush2.msra.mxu0 0.0
        %377 = vmatprep.mubr.f32.mxu0 0.0
        %378 = vmatmul.mubr.f32.gmra.mxu0 %v299
        %v379 = vpop.f32.mrf.mxu0
        %v380 = vadd.f32 %v280, %v379
        %v381 = vpop.f32.mrf.mxu0
        %382 = vmatprep.mubr.f32.mxu0 0.0
        %383 = vmatmul.mubr.f32.gmra.mxu0 %v302
        %v384 = vpop.f32.mrf.mxu0
        %v385 = vadd.f32 %v285, %v384
        %v386 = vpop.f32.mrf.mxu0
        %387 = vmatprep.mubr.f32.mxu0 0.0
        %388 = vmatmul.mubr.f32.gmra.mxu0 %v305
        %v389 = vpop.f32.mrf.mxu0
        %v390 = vadd.f32 %v290, %v389
        %v391 = vpop.f32.mrf.mxu0
        %392 = vmatprep.mubr.f32.mxu0 0.0
        %393 = vmatmul.mubr.f32.gmra.mxu0 %v308
        %v394 = vpop.f32.mrf.mxu0
        %v395 = vadd.f32 %v295, %v394
        %v396 = vpop.f32.mrf.mxu0
        %397 = vdwg.mxu0
        %s398 = scalar_lea.vmem [#allocation2], 2
        %v399 = vld [vmem:[%s398] ss:$2 sm:$0xff]
        %s400 = scalar_lea.vmem [#allocation2], 18
        %v401 = vld [vmem:[%s400] ss:$2 sm:$0xff]
        %s402 = scalar_lea.vmem [#allocation2], 34
        %v403 = vld [vmem:[%s402] ss:$2 sm:$0xff]
        %s404 = scalar_lea.vmem [#allocation2], 50
        %v405 = vld [vmem:[%s404] ss:$2 sm:$0x1f]
        %v406 = vld [vmem:[%s1 + $0x8] sm:$0xf]
        %v408 = vsel %vm171, %v399, 0
        %v411 = vsel %vm171, %v401, 0
        %v414 = vsel %vm171, %v403, 0
        %v417 = vsel %vm171, %v405, 0
        %v420 = vsel %vm209, %v406, 0
        %422 = vmatprep.subr.mxu0 0.0
        %423 = vmatpush1.msra.mxu0 0.0
        %424 = vmatprep.subr.mxu0 0.0
        %425 = vmatpush1.msra.mxu0 0.0
        %426 = vmatprep.subr.mxu0 0.0
        %427 = vmatpush1.msra.mxu0 0.0
        %428 = vmatprep.subr.mxu0 0.0
        %429 = vmatpush1.msra.mxu0 0.0
        %430 = vmatprep.subr.mxu0 0.0
        %431 = vmatpush1.msra.mxu0 0.0
        %432 = vmatprep.subr.mxu0 0.0
        %433 = vmatpush1.msra.mxu0 0.0
        %434 = vmatprep.subr.mxu0 0.0
        %435 = vmatpush1.msra.mxu0 0.0
        %436 = vmatprep.subr.mxu0 0.0
        %437 = vmatpush1.msra.mxu0 0.0
        %438 = vmatprep.subr.mxu0 0.0
        %439 = vmatpush1.msra.mxu0 0.0
        %440 = vmatprep.subr.mxu0 0.0
        %441 = vmatpush1.msra.mxu0 0.0
        %442 = vmatprep.subr.mxu0 0.0
        %443 = vmatpush1.msra.mxu0 0.0
        %444 = vmatprep.subr.mxu0 0.0
        %445 = vmatpush1.msra.mxu0 0.0
        %446 = vmatprep.subr.mxu0 0.0
        %447 = vmatpush1.msra.mxu0 0.0
        %448 = vmatprep.subr.mxu0 0.0
        %449 = vmatpush1.msra.mxu0 0.0
        %450 = vmatprep.subr.mxu0 0.0
        %451 = vmatpush1.msra.mxu0 0.0
        %452 = vmatprep.subr.mxu0 0.0
        %453 = vmatpush1.msra.mxu0 %v420
        %454 = vmatprep.subr.mxu0 0.0
        %455 = vmatpush2.msra.mxu0 0.0
        %456 = vmatprep.subr.mxu0 0.0
        %457 = vmatpush2.msra.mxu0 0.0
        %458 = vmatprep.subr.mxu0 0.0
        %459 = vmatpush2.msra.mxu0 0.0
        %460 = vmatprep.subr.mxu0 0.0
        %461 = vmatpush2.msra.mxu0 0.0
        %462 = vmatprep.subr.mxu0 0.0
        %463 = vmatpush2.msra.mxu0 0.0
        %464 = vmatprep.subr.mxu0 0.0
        %465 = vmatpush2.msra.mxu0 0.0
        %466 = vmatprep.subr.mxu0 0.0
        %467 = vmatpush2.msra.mxu0 0.0
        %468 = vmatprep.subr.mxu0 0.0
        %469 = vmatpush2.msra.mxu0 0.0
        %470 = vmatprep.subr.mxu0 0.0
        %471 = vmatpush2.msra.mxu0 0.0
        %472 = vmatprep.subr.mxu0 0.0
        %473 = vmatpush2.msra.mxu0 0.0
        %474 = vmatprep.subr.mxu0 0.0
        %475 = vmatpush2.msra.mxu0 0.0
        %476 = vmatprep.subr.mxu0 0.0
        %477 = vmatpush2.msra.mxu0 0.0
        %478 = vmatprep.subr.mxu0 0.0
        %479 = vmatpush2.msra.mxu0 0.0
        %480 = vmatprep.subr.mxu0 0.0
        %481 = vmatpush2.msra.mxu0 0.0
        %482 = vmatprep.subr.mxu0 0.0
        %483 = vmatpush2.msra.mxu0 0.0
        %484 = vmatprep.subr.mxu0 0.0
        %485 = vmatpush2.msra.mxu0 0.0
        %486 = vmatprep.mubr.f32.mxu0 0.0
        %487 = vmatmul.mubr.f32.gmra.mxu0 %v408
        %v488 = vpop.f32.mrf.mxu0
        %v489 = vadd.f32 0.0, %v488
        %v490 = vpop.f32.mrf.mxu0
        %491 = vmatprep.mubr.f32.mxu0 0.0
        %492 = vmatmul.mubr.f32.gmra.mxu0 %v411
        %v493 = vpop.f32.mrf.mxu0
        %v494 = vadd.f32 0.0, %v493
        %v495 = vpop.f32.mrf.mxu0
        %496 = vmatprep.mubr.f32.mxu0 0.0
        %497 = vmatmul.mubr.f32.gmra.mxu0 %v414
        %v498 = vpop.f32.mrf.mxu0
        %v499 = vadd.f32 0.0, %v498
        %v500 = vpop.f32.mrf.mxu0
        %501 = vmatprep.mubr.f32.mxu0 0.0
        %502 = vmatmul.mubr.f32.gmra.mxu0 %v417
        %v503 = vpop.f32.mrf.mxu0
        %v504 = vadd.f32 0.0, %v503
        %v505 = vpop.f32.mrf.mxu0
        %506 = vdwg.mxu0
        %v507 = vadd.f32 %v380, %v489
        %v508 = vadd.f32 %v385, %v494
        %v509 = vadd.f32 %v390, %v499
        %v510 = vadd.f32 %v395, %v504
        %s511 = scalar_lea.vmem [#allocation2], 3
        %v512 = vld [vmem:[%s511] ss:$2 sm:$0xff]
        %s513 = scalar_lea.vmem [#allocation2], 19
        %v514 = vld [vmem:[%s513] ss:$2 sm:$0xff]
        %s515 = scalar_lea.vmem [#allocation2], 35
        %v516 = vld [vmem:[%s515] ss:$2 sm:$0xff]
        %s517 = scalar_lea.vmem [#allocation2], 51
        %v518 = vld [vmem:[%s517] ss:$2 sm:$0x1f]
        %v519 = vld [vmem:[%s1 + $0xc] sm:$0xf]
        %v521 = vsel %vm171, %v512, 0
        %v524 = vsel %vm171, %v514, 0
        %v527 = vsel %vm171, %v516, 0
        %v530 = vsel %vm171, %v518, 0
        %v533 = vsel %vm209, %v519, 0
        %535 = vmatprep.subr.mxu0 0.0
        %536 = vmatpush1.msra.mxu0 0.0
        %537 = vmatprep.subr.mxu0 0.0
        %538 = vmatpush1.msra.mxu0 0.0
        %539 = vmatprep.subr.mxu0 0.0
        %540 = vmatpush1.msra.mxu0 0.0
        %541 = vmatprep.subr.mxu0 0.0
        %542 = vmatpush1.msra.mxu0 0.0
        %543 = vmatprep.subr.mxu0 0.0
        %544 = vmatpush1.msra.mxu0 0.0
        %545 = vmatprep.subr.mxu0 0.0
        %546 = vmatpush1.msra.mxu0 0.0
        %547 = vmatprep.subr.mxu0 0.0
        %548 = vmatpush1.msra.mxu0 0.0
        %549 = vmatprep.subr.mxu0 0.0
        %550 = vmatpush1.msra.mxu0 0.0
        %551 = vmatprep.subr.mxu0 0.0
        %552 = vmatpush1.msra.mxu0 0.0
        %553 = vmatprep.subr.mxu0 0.0
        %554 = vmatpush1.msra.mxu0 0.0
        %555 = vmatprep.subr.mxu0 0.0
        %556 = vmatpush1.msra.mxu0 0.0
        %557 = vmatprep.subr.mxu0 0.0
        %558 = vmatpush1.msra.mxu0 0.0
        %559 = vmatprep.subr.mxu0 0.0
        %560 = vmatpush1.msra.mxu0 0.0
        %561 = vmatprep.subr.mxu0 0.0
        %562 = vmatpush1.msra.mxu0 0.0
        %563 = vmatprep.subr.mxu0 0.0
        %564 = vmatpush1.msra.mxu0 0.0
        %565 = vmatprep.subr.mxu0 0.0
        %566 = vmatpush1.msra.mxu0 %v533
        %567 = vmatprep.subr.mxu0 0.0
        %568 = vmatpush2.msra.mxu0 0.0
        %569 = vmatprep.subr.mxu0 0.0
        %570 = vmatpush2.msra.mxu0 0.0
        %571 = vmatprep.subr.mxu0 0.0
        %572 = vmatpush2.msra.mxu0 0.0
        %573 = vmatprep.subr.mxu0 0.0
        %574 = vmatpush2.msra.mxu0 0.0
        %575 = vmatprep.subr.mxu0 0.0
        %576 = vmatpush2.msra.mxu0 0.0
        %577 = vmatprep.subr.mxu0 0.0
        %578 = vmatpush2.msra.mxu0 0.0
        %579 = vmatprep.subr.mxu0 0.0
        %580 = vmatpush2.msra.mxu0 0.0
        %581 = vmatprep.subr.mxu0 0.0
        %582 = vmatpush2.msra.mxu0 0.0
        %583 = vmatprep.subr.mxu0 0.0
        %584 = vmatpush2.msra.mxu0 0.0
        %585 = vmatprep.subr.mxu0 0.0
        %586 = vmatpush2.msra.mxu0 0.0
        %587 = vmatprep.subr.mxu0 0.0
        %588 = vmatpush2.msra.mxu0 0.0
        %589 = vmatprep.subr.mxu0 0.0
        %590 = vmatpush2.msra.mxu0 0.0
        %591 = vmatprep.subr.mxu0 0.0
        %592 = vmatpush2.msra.mxu0 0.0
        %593 = vmatprep.subr.mxu0 0.0
        %594 = vmatpush2.msra.mxu0 0.0
        %595 = vmatprep.subr.mxu0 0.0
        %596 = vmatpush2.msra.mxu0 0.0
        %597 = vmatprep.subr.mxu0 0.0
        %598 = vmatpush2.msra.mxu0 0.0
        %599 = vmatprep.mubr.f32.mxu0 0.0
        %600 = vmatmul.mubr.f32.gmra.mxu0 %v521
        %v601 = vpop.f32.mrf.mxu0
        %v602 = vadd.f32 0.0, %v601
        %v603 = vpop.f32.mrf.mxu0
        %604 = vmatprep.mubr.f32.mxu0 0.0
        %605 = vmatmul.mubr.f32.gmra.mxu0 %v524
        %v606 = vpop.f32.mrf.mxu0
        %v607 = vadd.f32 0.0, %v606
        %v608 = vpop.f32.mrf.mxu0
        %609 = vmatprep.mubr.f32.mxu0 0.0
        %610 = vmatmul.mubr.f32.gmra.mxu0 %v527
        %v611 = vpop.f32.mrf.mxu0
        %v612 = vadd.f32 0.0, %v611
        %v613 = vpop.f32.mrf.mxu0
        %614 = vmatprep.mubr.f32.mxu0 0.0
        %615 = vmatmul.mubr.f32.gmra.mxu0 %v530
        %v616 = vpop.f32.mrf.mxu0
        %v617 = vadd.f32 0.0, %v616
        %v618 = vpop.f32.mrf.mxu0
        %619 = vdwg.mxu0
        %v620 = vadd.f32 %v507, %v602
        %v621 = vadd.f32 %v508, %v607
        %v622 = vadd.f32 %v509, %v612
        %v623 = vadd.f32 %v510, %v617
        %s624 = scalar_lea.vmem [#allocation2], 4
        %v625 = vld [vmem:[%s624] ss:$2 sm:$0xff]
        %s626 = scalar_lea.vmem [#allocation2], 20
        %v627 = vld [vmem:[%s626] ss:$2 sm:$0xff]
        %s628 = scalar_lea.vmem [#allocation2], 36
        %v629 = vld [vmem:[%s628] ss:$2 sm:$0xff]
        %s630 = scalar_lea.vmem [#allocation2], 52
        %v631 = vld [vmem:[%s630] ss:$2 sm:$0x1f]
        %v632 = vld [vmem:[%s1 + $0x10] sm:$0xf]
        %v634 = vsel %vm171, %v625, 0
        %v637 = vsel %vm171, %v627, 0
        %v640 = vsel %vm171, %v629, 0
        %v643 = vsel %vm171, %v631, 0
        %v646 = vsel %vm209, %v632, 0
        %648 = vmatprep.subr.mxu0 0.0
        %649 = vmatpush1.msra.mxu0 0.0
        %650 = vmatprep.subr.mxu0 0.0
        %651 = vmatpush1.msra.mxu0 0.0
        %652 = vmatprep.subr.mxu0 0.0
        %653 = vmatpush1.msra.mxu0 0.0
        %654 = vmatprep.subr.mxu0 0.0
        %655 = vmatpush1.msra.mxu0 0.0
        %656 = vmatprep.subr.mxu0 0.0
        %657 = vmatpush1.msra.mxu0 0.0
        %658 = vmatprep.subr.mxu0 0.0
        %659 = vmatpush1.msra.mxu0 0.0
        %660 = vmatprep.subr.mxu0 0.0
        %661 = vmatpush1.msra.mxu0 0.0
        %662 = vmatprep.subr.mxu0 0.0
        %663 = vmatpush1.msra.mxu0 0.0
        %664 = vmatprep.subr.mxu0 0.0
        %665 = vmatpush1.msra.mxu0 0.0
        %666 = vmatprep.subr.mxu0 0.0
        %667 = vmatpush1.msra.mxu0 0.0
        %668 = vmatprep.subr.mxu0 0.0
        %669 = vmatpush1.msra.mxu0 0.0
        %670 = vmatprep.subr.mxu0 0.0
        %671 = vmatpush1.msra.mxu0 0.0
        %672 = vmatprep.subr.mxu0 0.0
        %673 = vmatpush1.msra.mxu0 0.0
        %674 = vmatprep.subr.mxu0 0.0
        %675 = vmatpush1.msra.mxu0 0.0
        %676 = vmatprep.subr.mxu0 0.0
        %677 = vmatpush1.msra.mxu0 0.0
        %678 = vmatprep.subr.mxu0 0.0
        %679 = vmatpush1.msra.mxu0 %v646
        %680 = vmatprep.subr.mxu0 0.0
        %681 = vmatpush2.msra.mxu0 0.0
        %682 = vmatprep.subr.mxu0 0.0
        %683 = vmatpush2.msra.mxu0 0.0
        %684 = vmatprep.subr.mxu0 0.0
        %685 = vmatpush2.msra.mxu0 0.0
        %686 = vmatprep.subr.mxu0 0.0
        %687 = vmatpush2.msra.mxu0 0.0
        %688 = vmatprep.subr.mxu0 0.0
        %689 = vmatpush2.msra.mxu0 0.0
        %690 = vmatprep.subr.mxu0 0.0
        %691 = vmatpush2.msra.mxu0 0.0
        %692 = vmatprep.subr.mxu0 0.0
        %693 = vmatpush2.msra.mxu0 0.0
        %694 = vmatprep.subr.mxu0 0.0
        %695 = vmatpush2.msra.mxu0 0.0
        %696 = vmatprep.subr.mxu0 0.0
        %697 = vmatpush2.msra.mxu0 0.0
        %698 = vmatprep.subr.mxu0 0.0
        %699 = vmatpush2.msra.mxu0 0.0
        %700 = vmatprep.subr.mxu0 0.0
        %701 = vmatpush2.msra.mxu0 0.0
        %702 = vmatprep.subr.mxu0 0.0
        %703 = vmatpush2.msra.mxu0 0.0
        %704 = vmatprep.subr.mxu0 0.0
        %705 = vmatpush2.msra.mxu0 0.0
        %706 = vmatprep.subr.mxu0 0.0
        %707 = vmatpush2.msra.mxu0 0.0
        %708 = vmatprep.subr.mxu0 0.0
        %709 = vmatpush2.msra.mxu0 0.0
        %710 = vmatprep.subr.mxu0 0.0
        %711 = vmatpush2.msra.mxu0 0.0
        %712 = vmatprep.mubr.f32.mxu0 0.0
        %713 = vmatmul.mubr.f32.gmra.mxu0 %v634
        %v714 = vpop.f32.mrf.mxu0
        %v715 = vadd.f32 0.0, %v714
        %v716 = vpop.f32.mrf.mxu0
        %717 = vmatprep.mubr.f32.mxu0 0.0
        %718 = vmatmul.mubr.f32.gmra.mxu0 %v637
        %v719 = vpop.f32.mrf.mxu0
        %v720 = vadd.f32 0.0, %v719
        %v721 = vpop.f32.mrf.mxu0
        %722 = vmatprep.mubr.f32.mxu0 0.0
        %723 = vmatmul.mubr.f32.gmra.mxu0 %v640
        %v724 = vpop.f32.mrf.mxu0
        %v725 = vadd.f32 0.0, %v724
        %v726 = vpop.f32.mrf.mxu0
        %727 = vmatprep.mubr.f32.mxu0 0.0
        %728 = vmatmul.mubr.f32.gmra.mxu0 %v643
        %v729 = vpop.f32.mrf.mxu0
        %v730 = vadd.f32 0.0, %v729
        %v731 = vpop.f32.mrf.mxu0
        %732 = vdwg.mxu0
        %v733 = vadd.f32 %v620, %v715
        %v734 = vadd.f32 %v621, %v720
        %v735 = vadd.f32 %v622, %v725
        %v736 = vadd.f32 %v623, %v730
        %s737 = scalar_lea.vmem [#allocation2], 5
        %v738 = vld [vmem:[%s737] ss:$2 sm:$0xff]
        %s739 = scalar_lea.vmem [#allocation2], 21
        %v740 = vld [vmem:[%s739] ss:$2 sm:$0xff]
        %s741 = scalar_lea.vmem [#allocation2], 37
        %v742 = vld [vmem:[%s741] ss:$2 sm:$0xff]
        %s743 = scalar_lea.vmem [#allocation2], 53
        %v744 = vld [vmem:[%s743] ss:$2 sm:$0x1f]
        %v745 = vld [vmem:[%s1 + $0x14] sm:$0xf]
        %v747 = vsel %vm171, %v738, 0
        %v750 = vsel %vm171, %v740, 0
        %v753 = vsel %vm171, %v742, 0
        %v756 = vsel %vm171, %v744, 0
        %v759 = vsel %vm209, %v745, 0
        %761 = vmatprep.subr.mxu0 0.0
        %762 = vmatpush1.msra.mxu0 0.0
        %763 = vmatprep.subr.mxu0 0.0
        %764 = vmatpush1.msra.mxu0 0.0
        %765 = vmatprep.subr.mxu0 0.0
        %766 = vmatpush1.msra.mxu0 0.0
        %767 = vmatprep.subr.mxu0 0.0
        %768 = vmatpush1.msra.mxu0 0.0
        %769 = vmatprep.subr.mxu0 0.0
        %770 = vmatpush1.msra.mxu0 0.0
        %771 = vmatprep.subr.mxu0 0.0
        %772 = vmatpush1.msra.mxu0 0.0
        %773 = vmatprep.subr.mxu0 0.0
        %774 = vmatpush1.msra.mxu0 0.0
        %775 = vmatprep.subr.mxu0 0.0
        %776 = vmatpush1.msra.mxu0 0.0
        %777 = vmatprep.subr.mxu0 0.0
        %778 = vmatpush1.msra.mxu0 0.0
        %779 = vmatprep.subr.mxu0 0.0
        %780 = vmatpush1.msra.mxu0 0.0
        %781 = vmatprep.subr.mxu0 0.0
        %782 = vmatpush1.msra.mxu0 0.0
        %783 = vmatprep.subr.mxu0 0.0
        %784 = vmatpush1.msra.mxu0 0.0
        %785 = vmatprep.subr.mxu0 0.0
        %786 = vmatpush1.msra.mxu0 0.0
        %787 = vmatprep.subr.mxu0 0.0
        %788 = vmatpush1.msra.mxu0 0.0
        %789 = vmatprep.subr.mxu0 0.0
        %790 = vmatpush1.msra.mxu0 0.0
        %791 = vmatprep.subr.mxu0 0.0
        %792 = vmatpush1.msra.mxu0 %v759
        %793 = vmatprep.subr.mxu0 0.0
        %794 = vmatpush2.msra.mxu0 0.0
        %795 = vmatprep.subr.mxu0 0.0
        %796 = vmatpush2.msra.mxu0 0.0
        %797 = vmatprep.subr.mxu0 0.0
        %798 = vmatpush2.msra.mxu0 0.0
        %799 = vmatprep.subr.mxu0 0.0
        %800 = vmatpush2.msra.mxu0 0.0
        %801 = vmatprep.subr.mxu0 0.0
        %802 = vmatpush2.msra.mxu0 0.0
        %803 = vmatprep.subr.mxu0 0.0
        %804 = vmatpush2.msra.mxu0 0.0
        %805 = vmatprep.subr.mxu0 0.0
        %806 = vmatpush2.msra.mxu0 0.0
        %807 = vmatprep.subr.mxu0 0.0
        %808 = vmatpush2.msra.mxu0 0.0
        %809 = vmatprep.subr.mxu0 0.0
        %810 = vmatpush2.msra.mxu0 0.0
        %811 = vmatprep.subr.mxu0 0.0
        %812 = vmatpush2.msra.mxu0 0.0
        %813 = vmatprep.subr.mxu0 0.0
        %814 = vmatpush2.msra.mxu0 0.0
        %815 = vmatprep.subr.mxu0 0.0
        %816 = vmatpush2.msra.mxu0 0.0
        %817 = vmatprep.subr.mxu0 0.0
        %818 = vmatpush2.msra.mxu0 0.0
        %819 = vmatprep.subr.mxu0 0.0
        %820 = vmatpush2.msra.mxu0 0.0
        %821 = vmatprep.subr.mxu0 0.0
        %822 = vmatpush2.msra.mxu0 0.0
        %823 = vmatprep.subr.mxu0 0.0
        %824 = vmatpush2.msra.mxu0 0.0
        %825 = vmatprep.mubr.f32.mxu0 0.0
        %826 = vmatmul.mubr.f32.gmra.mxu0 %v747
        %v827 = vpop.f32.mrf.mxu0
        %v828 = vadd.f32 0.0, %v827
        %v829 = vpop.f32.mrf.mxu0
        %830 = vmatprep.mubr.f32.mxu0 0.0
        %831 = vmatmul.mubr.f32.gmra.mxu0 %v750
        %v832 = vpop.f32.mrf.mxu0
        %v833 = vadd.f32 0.0, %v832
        %v834 = vpop.f32.mrf.mxu0
        %835 = vmatprep.mubr.f32.mxu0 0.0
        %836 = vmatmul.mubr.f32.gmra.mxu0 %v753
        %v837 = vpop.f32.mrf.mxu0
        %v838 = vadd.f32 0.0, %v837
        %v839 = vpop.f32.mrf.mxu0
        %840 = vmatprep.mubr.f32.mxu0 0.0
        %841 = vmatmul.mubr.f32.gmra.mxu0 %v756
        %v842 = vpop.f32.mrf.mxu0
        %v843 = vadd.f32 0.0, %v842
        %v844 = vpop.f32.mrf.mxu0
        %845 = vdwg.mxu0
        %v846 = vadd.f32 %v733, %v828
        %v847 = vadd.f32 %v734, %v833
        %v848 = vadd.f32 %v735, %v838
        %v849 = vadd.f32 %v736, %v843
        %s850 = scalar_lea.vmem [#allocation2], 6
        %v851 = vld [vmem:[%s850] ss:$2 sm:$0xff]
        %s852 = scalar_lea.vmem [#allocation2], 22
        %v853 = vld [vmem:[%s852] ss:$2 sm:$0xff]
        %s854 = scalar_lea.vmem [#allocation2], 38
        %v855 = vld [vmem:[%s854] ss:$2 sm:$0xff]
        %s856 = scalar_lea.vmem [#allocation2], 54
        %v857 = vld [vmem:[%s856] ss:$2 sm:$0x1f]
        %v858 = vld [vmem:[%s1 + $0x18] sm:$0xf]
        %v860 = vsel %vm171, %v851, 0
        %v863 = vsel %vm171, %v853, 0
        %v866 = vsel %vm171, %v855, 0
        %v869 = vsel %vm171, %v857, 0
        %v872 = vsel %vm209, %v858, 0
        %874 = vmatprep.subr.mxu0 0.0
        %875 = vmatpush1.msra.mxu0 0.0
        %876 = vmatprep.subr.mxu0 0.0
        %877 = vmatpush1.msra.mxu0 0.0
        %878 = vmatprep.subr.mxu0 0.0
        %879 = vmatpush1.msra.mxu0 0.0
        %880 = vmatprep.subr.mxu0 0.0
        %881 = vmatpush1.msra.mxu0 0.0
        %882 = vmatprep.subr.mxu0 0.0
        %883 = vmatpush1.msra.mxu0 0.0
        %884 = vmatprep.subr.mxu0 0.0
        %885 = vmatpush1.msra.mxu0 0.0
        %886 = vmatprep.subr.mxu0 0.0
        %887 = vmatpush1.msra.mxu0 0.0
        %888 = vmatprep.subr.mxu0 0.0
        %889 = vmatpush1.msra.mxu0 0.0
        %890 = vmatprep.subr.mxu0 0.0
        %891 = vmatpush1.msra.mxu0 0.0
        %892 = vmatprep.subr.mxu0 0.0
        %893 = vmatpush1.msra.mxu0 0.0
        %894 = vmatprep.subr.mxu0 0.0
        %895 = vmatpush1.msra.mxu0 0.0
        %896 = vmatprep.subr.mxu0 0.0
        %897 = vmatpush1.msra.mxu0 0.0
        %898 = vmatprep.subr.mxu0 0.0
        %899 = vmatpush1.msra.mxu0 0.0
        %900 = vmatprep.subr.mxu0 0.0
        %901 = vmatpush1.msra.mxu0 0.0
        %902 = vmatprep.subr.mxu0 0.0
        %903 = vmatpush1.msra.mxu0 0.0
        %904 = vmatprep.subr.mxu0 0.0
        %905 = vmatpush1.msra.mxu0 %v872
        %906 = vmatprep.subr.mxu0 0.0
        %907 = vmatpush2.msra.mxu0 0.0
        %908 = vmatprep.subr.mxu0 0.0
        %909 = vmatpush2.msra.mxu0 0.0
        %910 = vmatprep.subr.mxu0 0.0
        %911 = vmatpush2.msra.mxu0 0.0
        %912 = vmatprep.subr.mxu0 0.0
        %913 = vmatpush2.msra.mxu0 0.0
        %914 = vmatprep.subr.mxu0 0.0
        %915 = vmatpush2.msra.mxu0 0.0
        %916 = vmatprep.subr.mxu0 0.0
        %917 = vmatpush2.msra.mxu0 0.0
        %918 = vmatprep.subr.mxu0 0.0
        %919 = vmatpush2.msra.mxu0 0.0
        %920 = vmatprep.subr.mxu0 0.0
        %921 = vmatpush2.msra.mxu0 0.0
        %922 = vmatprep.subr.mxu0 0.0
        %923 = vmatpush2.msra.mxu0 0.0
        %924 = vmatprep.subr.mxu0 0.0
        %925 = vmatpush2.msra.mxu0 0.0
        %926 = vmatprep.subr.mxu0 0.0
        %927 = vmatpush2.msra.mxu0 0.0
        %928 = vmatprep.subr.mxu0 0.0
        %929 = vmatpush2.msra.mxu0 0.0
        %930 = vmatprep.subr.mxu0 0.0
        %931 = vmatpush2.msra.mxu0 0.0
        %932 = vmatprep.subr.mxu0 0.0
        %933 = vmatpush2.msra.mxu0 0.0
        %934 = vmatprep.subr.mxu0 0.0
        %935 = vmatpush2.msra.mxu0 0.0
        %936 = vmatprep.subr.mxu0 0.0
        %937 = vmatpush2.msra.mxu0 0.0
        %938 = vmatprep.mubr.f32.mxu0 0.0
        %939 = vmatmul.mubr.f32.gmra.mxu0 %v860
        %v940 = vpop.f32.mrf.mxu0
        %v941 = vadd.f32 0.0, %v940
        %v942 = vpop.f32.mrf.mxu0
        %943 = vmatprep.mubr.f32.mxu0 0.0
        %944 = vmatmul.mubr.f32.gmra.mxu0 %v863
        %v945 = vpop.f32.mrf.mxu0
        %v946 = vadd.f32 0.0, %v945
        %v947 = vpop.f32.mrf.mxu0
        %948 = vmatprep.mubr.f32.mxu0 0.0
        %949 = vmatmul.mubr.f32.gmra.mxu0 %v866
        %v950 = vpop.f32.mrf.mxu0
        %v951 = vadd.f32 0.0, %v950
        %v952 = vpop.f32.mrf.mxu0
        %953 = vmatprep.mubr.f32.mxu0 0.0
        %954 = vmatmul.mubr.f32.gmra.mxu0 %v869
        %v955 = vpop.f32.mrf.mxu0
        %v956 = vadd.f32 0.0, %v955
        %v957 = vpop.f32.mrf.mxu0
        %958 = vdwg.mxu0
        %v959 = vadd.f32 %v846, %v941
        %v960 = vadd.f32 %v847, %v946
        %v961 = vadd.f32 %v848, %v951
        %v962 = vadd.f32 %v849, %v956
        %v963 = vld [vmem:[%s1 + $0x20] sm:$0x1]
        %v964 = vlaneseq
        %v965 = vshrl.u32 %v964, 7
        %v966 = vsub.s32 0, %v965
        %v967 = vrot.slane %v963, %v966
        %v968 = vadd.f32 %v959, %v967
        %v969 = vadd.f32 %v960, %v967
        %v970 = vadd.f32 %v961, %v967
        %v971 = vadd.f32 %v962, %v967
        %v972 = vmax.f32 %v968, 0.0
        %v973 = vmax.f32 %v969, 0.0
        %v974 = vmax.f32 %v970, 0.0
        %v975 = vmax.f32 %v971, 0.0
        %vm976 = vcmask 261120
        %977 = vst.msk [vmem:[#allocation3] sm:$0xff] %vm976, %v972
        %978 = vst.msk [vmem:[#allocation3 + $0x8] sm:$0xff] %vm976, %v973
        %979 = vst.msk [vmem:[#allocation3 + $0x10] sm:$0xff] %vm976, %v974
        %vm980 = vcmask 258048
        %981 = vst.msk [vmem:[#allocation3 + $0x18] sm:$0x1f] %vm980, %v975
        %v982 = vld [vmem:[#allocation3] ss:$2 sm:$0xff]
        %s983 = scalar_lea.vmem [#allocation3], 16
        %v984 = vld [vmem:[%s983] ss:$2 sm:$0xf]
        %v985 = vld [vmem:[%s1 + $0x28] sm:$0xff]
        %v986 = vld [vmem:[%s1 + $0x30] sm:$0xff]
        %v987 = vld [vmem:[%s1 + $0x38] sm:$0xff]
        %v988 = vld [vmem:[%s1 + $0x40] sm:$0xff]
        %s989 = scalar_lea.vmem [#allocation3], 1
        %v990 = vld [vmem:[%s989] ss:$2 sm:$0xff]
        %s991 = scalar_lea.vmem [#allocation3], 17
        %v992 = vld [vmem:[%s991] ss:$2 sm:$0xf]
        %v993 = vld [vmem:[%s1 + $0x48] sm:$0xff]
        %v994 = vld [vmem:[%s1 + $0x50] sm:$0xff]
        %v995 = vld [vmem:[%s1 + $0x58] sm:$0xff]
        %v996 = vld [vmem:[%s1 + $0x60] sm:$0xff]
        %v998 = vsel %vm976, %v990, 0
        %v1001 = vsel %vm976, %v992, 0
        %1003 = vmatprep.subr.mxu0 0.0
        %1004 = vmatpush1.msra.mxu0 0.0
        %1005 = vmatprep.subr.mxu0 0.0
        %1006 = vmatpush1.msra.mxu0 0.0
        %1007 = vmatprep.subr.mxu0 0.0
        %1008 = vmatpush1.msra.mxu0 0.0
        %1009 = vmatprep.subr.mxu0 0.0
        %1010 = vmatpush1.msra.mxu0 0.0
        %1011 = vmatprep.subr.mxu0 0.0
        %1012 = vmatpush1.msra.mxu0 0.0
        %1013 = vmatprep.subr.mxu0 0.0
        %1014 = vmatpush1.msra.mxu0 0.0
        %1015 = vmatprep.subr.mxu0 0.0
        %1016 = vmatpush1.msra.mxu0 0.0
        %1017 = vmatprep.subr.mxu0 0.0
        %1018 = vmatpush1.msra.mxu0 0.0
        %1019 = vmatprep.subr.mxu0 0.0
        %1020 = vmatpush1.msra.mxu0 0.0
        %1021 = vmatprep.subr.mxu0 0.0
        %1022 = vmatpush1.msra.mxu0 0.0
        %1023 = vmatprep.subr.mxu0 0.0
        %1024 = vmatpush1.msra.mxu0 0.0
        %1025 = vmatprep.subr.mxu0 0.0
        %1026 = vmatpush1.msra.mxu0 0.0
        %1027 = vmatprep.subr.mxu0 0.0
        %1028 = vmatpush1.msra.mxu0 %v996
        %1029 = vmatprep.subr.mxu0 0.0
        %1030 = vmatpush1.msra.mxu0 %v995
        %1031 = vmatprep.subr.mxu0 0.0
        %1032 = vmatpush1.msra.mxu0 %v994
        %1033 = vmatprep.subr.mxu0 0.0
        %1034 = vmatpush1.msra.mxu0 %v993
        %1035 = vmatprep.subr.mxu0 0.0
        %1036 = vmatpush2.msra.mxu0 0.0
        %1037 = vmatprep.subr.mxu0 0.0
        %1038 = vmatpush2.msra.mxu0 0.0
        %1039 = vmatprep.subr.mxu0 0.0
        %1040 = vmatpush2.msra.mxu0 0.0
        %1041 = vmatprep.subr.mxu0 0.0
        %1042 = vmatpush2.msra.mxu0 0.0
        %1043 = vmatprep.subr.mxu0 0.0
        %1044 = vmatpush2.msra.mxu0 0.0
        %1045 = vmatprep.subr.mxu0 0.0
        %1046 = vmatpush2.msra.mxu0 0.0
        %1047 = vmatprep.subr.mxu0 0.0
        %1048 = vmatpush2.msra.mxu0 0.0
        %1049 = vmatprep.subr.mxu0 0.0
        %1050 = vmatpush2.msra.mxu0 0.0
        %1051 = vmatprep.subr.mxu0 0.0
        %1052 = vmatpush2.msra.mxu0 0.0
        %1053 = vmatprep.subr.mxu0 0.0
        %1054 = vmatpush2.msra.mxu0 0.0
        %1055 = vmatprep.subr.mxu0 0.0
        %1056 = vmatpush2.msra.mxu0 0.0
        %1057 = vmatprep.subr.mxu0 0.0
        %1058 = vmatpush2.msra.mxu0 0.0
        %1059 = vmatprep.subr.mxu0 0.0
        %1060 = vmatpush2.msra.mxu0 0.0
        %1061 = vmatprep.subr.mxu0 0.0
        %1062 = vmatpush2.msra.mxu0 0.0
        %1063 = vmatprep.subr.mxu0 0.0
        %1064 = vmatpush2.msra.mxu0 0.0
        %1065 = vmatprep.subr.mxu0 0.0
        %1066 = vmatpush2.msra.mxu0 0.0
        %1067 = vmatprep.mubr.f32.mxu0 0.0
        %1068 = vmatmul.mubr.f32.gmra.mxu0 %v998
        %v1069 = vpop.f32.mrf.mxu0
        %v1070 = vadd.f32 0.0, %v1069
        %v1071 = vpop.f32.mrf.mxu0
        %1072 = vmatprep.mubr.f32.mxu0 0.0
        %1073 = vmatmul.mubr.f32.gmra.mxu0 %v1001
        %v1074 = vpop.f32.mrf.mxu0
        %v1075 = vadd.f32 0.0, %v1074
        %v1076 = vpop.f32.mrf.mxu0
        %1077 = vdwg.mxu0
        %v1079 = vsel %vm976, %v982, 0
        %v1082 = vsel %vm976, %v984, 0
        %1084 = vmatprep.subr.mxu0 0.0
        %1085 = vmatpush1.msra.mxu0 0.0
        %1086 = vmatprep.subr.mxu0 0.0
        %1087 = vmatpush1.msra.mxu0 0.0
        %1088 = vmatprep.subr.mxu0 0.0
        %1089 = vmatpush1.msra.mxu0 0.0
        %1090 = vmatprep.subr.mxu0 0.0
        %1091 = vmatpush1.msra.mxu0 0.0
        %1092 = vmatprep.subr.mxu0 0.0
        %1093 = vmatpush1.msra.mxu0 0.0
        %1094 = vmatprep.subr.mxu0 0.0
        %1095 = vmatpush1.msra.mxu0 0.0
        %1096 = vmatprep.subr.mxu0 0.0
        %1097 = vmatpush1.msra.mxu0 0.0
        %1098 = vmatprep.subr.mxu0 0.0
        %1099 = vmatpush1.msra.mxu0 0.0
        %1100 = vmatprep.subr.mxu0 0.0
        %1101 = vmatpush1.msra.mxu0 0.0
        %1102 = vmatprep.subr.mxu0 0.0
        %1103 = vmatpush1.msra.mxu0 0.0
        %1104 = vmatprep.subr.mxu0 0.0
        %1105 = vmatpush1.msra.mxu0 0.0
        %1106 = vmatprep.subr.mxu0 0.0
        %1107 = vmatpush1.msra.mxu0 0.0
        %1108 = vmatprep.subr.mxu0 0.0
        %1109 = vmatpush1.msra.mxu0 %v988
        %1110 = vmatprep.subr.mxu0 0.0
        %1111 = vmatpush1.msra.mxu0 %v987
        %1112 = vmatprep.subr.mxu0 0.0
        %1113 = vmatpush1.msra.mxu0 %v986
        %1114 = vmatprep.subr.mxu0 0.0
        %1115 = vmatpush1.msra.mxu0 %v985
        %1116 = vmatprep.subr.mxu0 0.0
        %1117 = vmatpush2.msra.mxu0 0.0
        %1118 = vmatprep.subr.mxu0 0.0
        %1119 = vmatpush2.msra.mxu0 0.0
        %1120 = vmatprep.subr.mxu0 0.0
        %1121 = vmatpush2.msra.mxu0 0.0
        %1122 = vmatprep.subr.mxu0 0.0
        %1123 = vmatpush2.msra.mxu0 0.0
        %1124 = vmatprep.subr.mxu0 0.0
        %1125 = vmatpush2.msra.mxu0 0.0
        %1126 = vmatprep.subr.mxu0 0.0
        %1127 = vmatpush2.msra.mxu0 0.0
        %1128 = vmatprep.subr.mxu0 0.0
        %1129 = vmatpush2.msra.mxu0 0.0
        %1130 = vmatprep.subr.mxu0 0.0
        %1131 = vmatpush2.msra.mxu0 0.0
        %1132 = vmatprep.subr.mxu0 0.0
        %1133 = vmatpush2.msra.mxu0 0.0
        %1134 = vmatprep.subr.mxu0 0.0
        %1135 = vmatpush2.msra.mxu0 0.0
        %1136 = vmatprep.subr.mxu0 0.0
        %1137 = vmatpush2.msra.mxu0 0.0
        %1138 = vmatprep.subr.mxu0 0.0
        %1139 = vmatpush2.msra.mxu0 0.0
        %1140 = vmatprep.subr.mxu0 0.0
        %1141 = vmatpush2.msra.mxu0 0.0
        %1142 = vmatprep.subr.mxu0 0.0
        %1143 = vmatpush2.msra.mxu0 0.0
        %1144 = vmatprep.subr.mxu0 0.0
        %1145 = vmatpush2.msra.mxu0 0.0
        %1146 = vmatprep.subr.mxu0 0.0
        %1147 = vmatpush2.msra.mxu0 0.0
        %1148 = vmatprep.mubr.f32.mxu0 0.0
        %1149 = vmatmul.mubr.f32.gmra.mxu0 %v1079
        %v1150 = vpop.f32.mrf.mxu0
        %v1151 = vadd.f32 %v1070, %v1150
        %v1152 = vpop.f32.mrf.mxu0
        %1153 = vmatprep.mubr.f32.mxu0 0.0
        %1154 = vmatmul.mubr.f32.gmra.mxu0 %v1082
        %v1155 = vpop.f32.mrf.mxu0
        %v1156 = vadd.f32 %v1075, %v1155
        %v1157 = vpop.f32.mrf.mxu0
        %1158 = vdwg.mxu0
        %s1159 = scalar_lea.vmem [#allocation3], 2
        %v1160 = vld [vmem:[%s1159] ss:$2 sm:$0xff]
        %s1161 = scalar_lea.vmem [#allocation3], 18
        %v1162 = vld [vmem:[%s1161] ss:$2 sm:$0xf]
        %v1163 = vld [vmem:[%s1 + $0x68] sm:$0xff]
        %v1164 = vld [vmem:[%s1 + $0x70] sm:$0xff]
        %v1165 = vld [vmem:[%s1 + $0x78] sm:$0xff]
        %v1166 = vld [vmem:[%s1 + $0x80] sm:$0xff]
        %v1168 = vsel %vm976, %v1160, 0
        %v1171 = vsel %vm976, %v1162, 0
        %1173 = vmatprep.subr.mxu0 0.0
        %1174 = vmatpush1.msra.mxu0 0.0
        %1175 = vmatprep.subr.mxu0 0.0
        %1176 = vmatpush1.msra.mxu0 0.0
        %1177 = vmatprep.subr.mxu0 0.0
        %1178 = vmatpush1.msra.mxu0 0.0
        %1179 = vmatprep.subr.mxu0 0.0
        %1180 = vmatpush1.msra.mxu0 0.0
        %1181 = vmatprep.subr.mxu0 0.0
        %1182 = vmatpush1.msra.mxu0 0.0
        %1183 = vmatprep.subr.mxu0 0.0
        %1184 = vmatpush1.msra.mxu0 0.0
        %1185 = vmatprep.subr.mxu0 0.0
        %1186 = vmatpush1.msra.mxu0 0.0
        %1187 = vmatprep.subr.mxu0 0.0
        %1188 = vmatpush1.msra.mxu0 0.0
        %1189 = vmatprep.subr.mxu0 0.0
        %1190 = vmatpush1.msra.mxu0 0.0
        %1191 = vmatprep.subr.mxu0 0.0
        %1192 = vmatpush1.msra.mxu0 0.0
        %1193 = vmatprep.subr.mxu0 0.0
        %1194 = vmatpush1.msra.mxu0 0.0
        %1195 = vmatprep.subr.mxu0 0.0
        %1196 = vmatpush1.msra.mxu0 0.0
        %1197 = vmatprep.subr.mxu0 0.0
        %1198 = vmatpush1.msra.mxu0 %v1166
        %1199 = vmatprep.subr.mxu0 0.0
        %1200 = vmatpush1.msra.mxu0 %v1165
        %1201 = vmatprep.subr.mxu0 0.0
        %1202 = vmatpush1.msra.mxu0 %v1164
        %1203 = vmatprep.subr.mxu0 0.0
        %1204 = vmatpush1.msra.mxu0 %v1163
        %1205 = vmatprep.subr.mxu0 0.0
        %1206 = vmatpush2.msra.mxu0 0.0
        %1207 = vmatprep.subr.mxu0 0.0
        %1208 = vmatpush2.msra.mxu0 0.0
        %1209 = vmatprep.subr.mxu0 0.0
        %1210 = vmatpush2.msra.mxu0 0.0
        %1211 = vmatprep.subr.mxu0 0.0
        %1212 = vmatpush2.msra.mxu0 0.0
        %1213 = vmatprep.subr.mxu0 0.0
        %1214 = vmatpush2.msra.mxu0 0.0
        %1215 = vmatprep.subr.mxu0 0.0
        %1216 = vmatpush2.msra.mxu0 0.0
        %1217 = vmatprep.subr.mxu0 0.0
        %1218 = vmatpush2.msra.mxu0 0.0
        %1219 = vmatprep.subr.mxu0 0.0
        %1220 = vmatpush2.msra.mxu0 0.0
        %1221 = vmatprep.subr.mxu0 0.0
        %1222 = vmatpush2.msra.mxu0 0.0
        %1223 = vmatprep.subr.mxu0 0.0
        %1224 = vmatpush2.msra.mxu0 0.0
        %1225 = vmatprep.subr.mxu0 0.0
        %1226 = vmatpush2.msra.mxu0 0.0
        %1227 = vmatprep.subr.mxu0 0.0
        %1228 = vmatpush2.msra.mxu0 0.0
        %1229 = vmatprep.subr.mxu0 0.0
        %1230 = vmatpush2.msra.mxu0 0.0
        %1231 = vmatprep.subr.mxu0 0.0
        %1232 = vmatpush2.msra.mxu0 0.0
        %1233 = vmatprep.subr.mxu0 0.0
        %1234 = vmatpush2.msra.mxu0 0.0
        %1235 = vmatprep.subr.mxu0 0.0
        %1236 = vmatpush2.msra.mxu0 0.0
        %1237 = vmatprep.mubr.f32.mxu0 0.0
        %1238 = vmatmul.mubr.f32.gmra.mxu0 %v1168
        %v1239 = vpop.f32.mrf.mxu0
        %v1240 = vadd.f32 0.0, %v1239
        %v1241 = vpop.f32.mrf.mxu0
        %1242 = vmatprep.mubr.f32.mxu0 0.0
        %1243 = vmatmul.mubr.f32.gmra.mxu0 %v1171
        %v1244 = vpop.f32.mrf.mxu0
        %v1245 = vadd.f32 0.0, %v1244
        %v1246 = vpop.f32.mrf.mxu0
        %1247 = vdwg.mxu0
        %v1248 = vadd.f32 %v1151, %v1240
        %v1249 = vadd.f32 %v1156, %v1245
        %s1250 = scalar_lea.vmem [#allocation3], 3
        %v1251 = vld [vmem:[%s1250] ss:$2 sm:$0xff]
        %s1252 = scalar_lea.vmem [#allocation3], 19
        %v1253 = vld [vmem:[%s1252] ss:$2 sm:$0xf]
        %v1254 = vld [vmem:[%s1 + $0x88] sm:$0xff]
        %v1255 = vld [vmem:[%s1 + $0x90] sm:$0xff]
        %v1256 = vld [vmem:[%s1 + $0x98] sm:$0xff]
        %v1257 = vld [vmem:[%s1 + $0xa0] sm:$0xff]
        %v1259 = vsel %vm976, %v1251, 0
        %v1262 = vsel %vm976, %v1253, 0
        %1264 = vmatprep.subr.mxu0 0.0
        %1265 = vmatpush1.msra.mxu0 0.0
        %1266 = vmatprep.subr.mxu0 0.0
        %1267 = vmatpush1.msra.mxu0 0.0
        %1268 = vmatprep.subr.mxu0 0.0
        %1269 = vmatpush1.msra.mxu0 0.0
        %1270 = vmatprep.subr.mxu0 0.0
        %1271 = vmatpush1.msra.mxu0 0.0
        %1272 = vmatprep.subr.mxu0 0.0
        %1273 = vmatpush1.msra.mxu0 0.0
        %1274 = vmatprep.subr.mxu0 0.0
        %1275 = vmatpush1.msra.mxu0 0.0
        %1276 = vmatprep.subr.mxu0 0.0
        %1277 = vmatpush1.msra.mxu0 0.0
        %1278 = vmatprep.subr.mxu0 0.0
        %1279 = vmatpush1.msra.mxu0 0.0
        %1280 = vmatprep.subr.mxu0 0.0
        %1281 = vmatpush1.msra.mxu0 0.0
        %1282 = vmatprep.subr.mxu0 0.0
        %1283 = vmatpush1.msra.mxu0 0.0
        %1284 = vmatprep.subr.mxu0 0.0
        %1285 = vmatpush1.msra.mxu0 0.0
        %1286 = vmatprep.subr.mxu0 0.0
        %1287 = vmatpush1.msra.mxu0 0.0
        %1288 = vmatprep.subr.mxu0 0.0
        %1289 = vmatpush1.msra.mxu0 %v1257
        %1290 = vmatprep.subr.mxu0 0.0
        %1291 = vmatpush1.msra.mxu0 %v1256
        %1292 = vmatprep.subr.mxu0 0.0
        %1293 = vmatpush1.msra.mxu0 %v1255
        %1294 = vmatprep.subr.mxu0 0.0
        %1295 = vmatpush1.msra.mxu0 %v1254
        %1296 = vmatprep.subr.mxu0 0.0
        %1297 = vmatpush2.msra.mxu0 0.0
        %1298 = vmatprep.subr.mxu0 0.0
        %1299 = vmatpush2.msra.mxu0 0.0
        %1300 = vmatprep.subr.mxu0 0.0
        %1301 = vmatpush2.msra.mxu0 0.0
        %1302 = vmatprep.subr.mxu0 0.0
        %1303 = vmatpush2.msra.mxu0 0.0
        %1304 = vmatprep.subr.mxu0 0.0
        %1305 = vmatpush2.msra.mxu0 0.0
        %1306 = vmatprep.subr.mxu0 0.0
        %1307 = vmatpush2.msra.mxu0 0.0
        %1308 = vmatprep.subr.mxu0 0.0
        %1309 = vmatpush2.msra.mxu0 0.0
        %1310 = vmatprep.subr.mxu0 0.0
        %1311 = vmatpush2.msra.mxu0 0.0
        %1312 = vmatprep.subr.mxu0 0.0
        %1313 = vmatpush2.msra.mxu0 0.0
        %1314 = vmatprep.subr.mxu0 0.0
        %1315 = vmatpush2.msra.mxu0 0.0
        %1316 = vmatprep.subr.mxu0 0.0
        %1317 = vmatpush2.msra.mxu0 0.0
        %1318 = vmatprep.subr.mxu0 0.0
        %1319 = vmatpush2.msra.mxu0 0.0
        %1320 = vmatprep.subr.mxu0 0.0
        %1321 = vmatpush2.msra.mxu0 0.0
        %1322 = vmatprep.subr.mxu0 0.0
        %1323 = vmatpush2.msra.mxu0 0.0
        %1324 = vmatprep.subr.mxu0 0.0
        %1325 = vmatpush2.msra.mxu0 0.0
        %1326 = vmatprep.subr.mxu0 0.0
        %1327 = vmatpush2.msra.mxu0 0.0
        %1328 = vmatprep.mubr.f32.mxu0 0.0
        %1329 = vmatmul.mubr.f32.gmra.mxu0 %v1259
        %v1330 = vpop.f32.mrf.mxu0
        %v1331 = vadd.f32 0.0, %v1330
        %v1332 = vpop.f32.mrf.mxu0
        %1333 = vmatprep.mubr.f32.mxu0 0.0
        %1334 = vmatmul.mubr.f32.gmra.mxu0 %v1262
        %v1335 = vpop.f32.mrf.mxu0
        %v1336 = vadd.f32 0.0, %v1335
        %v1337 = vpop.f32.mrf.mxu0
        %1338 = vdwg.mxu0
        %v1339 = vadd.f32 %v1248, %v1331
        %v1340 = vadd.f32 %v1249, %v1336
        %s1341 = scalar_lea.vmem [#allocation3], 4
        %v1342 = vld [vmem:[%s1341] ss:$2 sm:$0xff]
        %s1343 = scalar_lea.vmem [#allocation3], 20
        %v1344 = vld [vmem:[%s1343] ss:$2 sm:$0xf]
        %v1345 = vld [vmem:[%s1 + $0xa8] sm:$0xff]
        %v1346 = vld [vmem:[%s1 + $0xb0] sm:$0xff]
        %v1347 = vld [vmem:[%s1 + $0xb8] sm:$0xff]
        %v1348 = vld [vmem:[%s1 + $0xc0] sm:$0xff]
        %v1350 = vsel %vm976, %v1342, 0
        %v1353 = vsel %vm976, %v1344, 0
        %1355 = vmatprep.subr.mxu0 0.0
        %1356 = vmatpush1.msra.mxu0 0.0
        %1357 = vmatprep.subr.mxu0 0.0
        %1358 = vmatpush1.msra.mxu0 0.0
        %1359 = vmatprep.subr.mxu0 0.0
        %1360 = vmatpush1.msra.mxu0 0.0
        %1361 = vmatprep.subr.mxu0 0.0
        %1362 = vmatpush1.msra.mxu0 0.0
        %1363 = vmatprep.subr.mxu0 0.0
        %1364 = vmatpush1.msra.mxu0 0.0
        %1365 = vmatprep.subr.mxu0 0.0
        %1366 = vmatpush1.msra.mxu0 0.0
        %1367 = vmatprep.subr.mxu0 0.0
        %1368 = vmatpush1.msra.mxu0 0.0
        %1369 = vmatprep.subr.mxu0 0.0
        %1370 = vmatpush1.msra.mxu0 0.0
        %1371 = vmatprep.subr.mxu0 0.0
        %1372 = vmatpush1.msra.mxu0 0.0
        %1373 = vmatprep.subr.mxu0 0.0
        %1374 = vmatpush1.msra.mxu0 0.0
        %1375 = vmatprep.subr.mxu0 0.0
        %1376 = vmatpush1.msra.mxu0 0.0
        %1377 = vmatprep.subr.mxu0 0.0
        %1378 = vmatpush1.msra.mxu0 0.0
        %1379 = vmatprep.subr.mxu0 0.0
        %1380 = vmatpush1.msra.mxu0 %v1348
        %1381 = vmatprep.subr.mxu0 0.0
        %1382 = vmatpush1.msra.mxu0 %v1347
        %1383 = vmatprep.subr.mxu0 0.0
        %1384 = vmatpush1.msra.mxu0 %v1346
        %1385 = vmatprep.subr.mxu0 0.0
        %1386 = vmatpush1.msra.mxu0 %v1345
        %1387 = vmatprep.subr.mxu0 0.0
        %1388 = vmatpush2.msra.mxu0 0.0
        %1389 = vmatprep.subr.mxu0 0.0
        %1390 = vmatpush2.msra.mxu0 0.0
        %1391 = vmatprep.subr.mxu0 0.0
        %1392 = vmatpush2.msra.mxu0 0.0
        %1393 = vmatprep.subr.mxu0 0.0
        %1394 = vmatpush2.msra.mxu0 0.0
        %1395 = vmatprep.subr.mxu0 0.0
        %1396 = vmatpush2.msra.mxu0 0.0
        %1397 = vmatprep.subr.mxu0 0.0
        %1398 = vmatpush2.msra.mxu0 0.0
        %1399 = vmatprep.subr.mxu0 0.0
        %1400 = vmatpush2.msra.mxu0 0.0
        %1401 = vmatprep.subr.mxu0 0.0
        %1402 = vmatpush2.msra.mxu0 0.0
        %1403 = vmatprep.subr.mxu0 0.0
        %1404 = vmatpush2.msra.mxu0 0.0
        %1405 = vmatprep.subr.mxu0 0.0
        %1406 = vmatpush2.msra.mxu0 0.0
        %1407 = vmatprep.subr.mxu0 0.0
        %1408 = vmatpush2.msra.mxu0 0.0
        %1409 = vmatprep.subr.mxu0 0.0
        %1410 = vmatpush2.msra.mxu0 0.0
        %1411 = vmatprep.subr.mxu0 0.0
        %1412 = vmatpush2.msra.mxu0 0.0
        %1413 = vmatprep.subr.mxu0 0.0
        %1414 = vmatpush2.msra.mxu0 0.0
        %1415 = vmatprep.subr.mxu0 0.0
        %1416 = vmatpush2.msra.mxu0 0.0
        %1417 = vmatprep.subr.mxu0 0.0
        %1418 = vmatpush2.msra.mxu0 0.0
        %1419 = vmatprep.mubr.f32.mxu0 0.0
        %1420 = vmatmul.mubr.f32.gmra.mxu0 %v1350
        %v1421 = vpop.f32.mrf.mxu0
        %v1422 = vadd.f32 0.0, %v1421
        %v1423 = vpop.f32.mrf.mxu0
        %1424 = vmatprep.mubr.f32.mxu0 0.0
        %1425 = vmatmul.mubr.f32.gmra.mxu0 %v1353
        %v1426 = vpop.f32.mrf.mxu0
        %v1427 = vadd.f32 0.0, %v1426
        %v1428 = vpop.f32.mrf.mxu0
        %1429 = vdwg.mxu0
        %v1430 = vadd.f32 %v1339, %v1422
        %v1431 = vadd.f32 %v1340, %v1427
        %s1432 = scalar_lea.vmem [#allocation3], 5
        %v1433 = vld [vmem:[%s1432] ss:$2 sm:$0xff]
        %s1434 = scalar_lea.vmem [#allocation3], 21
        %v1435 = vld [vmem:[%s1434] ss:$2 sm:$0xf]
        %v1436 = vld [vmem:[%s1 + $0xc8] sm:$0xff]
        %v1437 = vld [vmem:[%s1 + $0xd0] sm:$0xff]
        %v1438 = vld [vmem:[%s1 + $0xd8] sm:$0xff]
        %v1439 = vld [vmem:[%s1 + $0xe0] sm:$0xff]
        %v1441 = vsel %vm976, %v1433, 0
        %v1444 = vsel %vm976, %v1435, 0
        %1446 = vmatprep.subr.mxu0 0.0
        %1447 = vmatpush1.msra.mxu0 0.0
        %1448 = vmatprep.subr.mxu0 0.0
        %1449 = vmatpush1.msra.mxu0 0.0
        %1450 = vmatprep.subr.mxu0 0.0
        %1451 = vmatpush1.msra.mxu0 0.0
        %1452 = vmatprep.subr.mxu0 0.0
        %1453 = vmatpush1.msra.mxu0 0.0
        %1454 = vmatprep.subr.mxu0 0.0
        %1455 = vmatpush1.msra.mxu0 0.0
        %1456 = vmatprep.subr.mxu0 0.0
        %1457 = vmatpush1.msra.mxu0 0.0
        %1458 = vmatprep.subr.mxu0 0.0
        %1459 = vmatpush1.msra.mxu0 0.0
        %1460 = vmatprep.subr.mxu0 0.0
        %1461 = vmatpush1.msra.mxu0 0.0
        %1462 = vmatprep.subr.mxu0 0.0
        %1463 = vmatpush1.msra.mxu0 0.0
        %1464 = vmatprep.subr.mxu0 0.0
        %1465 = vmatpush1.msra.mxu0 0.0
        %1466 = vmatprep.subr.mxu0 0.0
        %1467 = vmatpush1.msra.mxu0 0.0
        %1468 = vmatprep.subr.mxu0 0.0
        %1469 = vmatpush1.msra.mxu0 0.0
        %1470 = vmatprep.subr.mxu0 0.0
        %1471 = vmatpush1.msra.mxu0 %v1439
        %1472 = vmatprep.subr.mxu0 0.0
        %1473 = vmatpush1.msra.mxu0 %v1438
        %1474 = vmatprep.subr.mxu0 0.0
        %1475 = vmatpush1.msra.mxu0 %v1437
        %1476 = vmatprep.subr.mxu0 0.0
        %1477 = vmatpush1.msra.mxu0 %v1436
        %1478 = vmatprep.subr.mxu0 0.0
        %1479 = vmatpush2.msra.mxu0 0.0
        %1480 = vmatprep.subr.mxu0 0.0
        %1481 = vmatpush2.msra.mxu0 0.0
        %1482 = vmatprep.subr.mxu0 0.0
        %1483 = vmatpush2.msra.mxu0 0.0
        %1484 = vmatprep.subr.mxu0 0.0
        %1485 = vmatpush2.msra.mxu0 0.0
        %1486 = vmatprep.subr.mxu0 0.0
        %1487 = vmatpush2.msra.mxu0 0.0
        %1488 = vmatprep.subr.mxu0 0.0
        %1489 = vmatpush2.msra.mxu0 0.0
        %1490 = vmatprep.subr.mxu0 0.0
        %1491 = vmatpush2.msra.mxu0 0.0
        %1492 = vmatprep.subr.mxu0 0.0
        %1493 = vmatpush2.msra.mxu0 0.0
        %1494 = vmatprep.subr.mxu0 0.0
        %1495 = vmatpush2.msra.mxu0 0.0
        %1496 = vmatprep.subr.mxu0 0.0
        %1497 = vmatpush2.msra.mxu0 0.0
        %1498 = vmatprep.subr.mxu0 0.0
        %1499 = vmatpush2.msra.mxu0 0.0
        %1500 = vmatprep.subr.mxu0 0.0
        %1501 = vmatpush2.msra.mxu0 0.0
        %1502 = vmatprep.subr.mxu0 0.0
        %1503 = vmatpush2.msra.mxu0 0.0
        %1504 = vmatprep.subr.mxu0 0.0
        %1505 = vmatpush2.msra.mxu0 0.0
        %1506 = vmatprep.subr.mxu0 0.0
        %1507 = vmatpush2.msra.mxu0 0.0
        %1508 = vmatprep.subr.mxu0 0.0
        %1509 = vmatpush2.msra.mxu0 0.0
        %1510 = vmatprep.mubr.f32.mxu0 0.0
        %1511 = vmatmul.mubr.f32.gmra.mxu0 %v1441
        %v1512 = vpop.f32.mrf.mxu0
        %v1513 = vadd.f32 0.0, %v1512
        %v1514 = vpop.f32.mrf.mxu0
        %1515 = vmatprep.mubr.f32.mxu0 0.0
        %1516 = vmatmul.mubr.f32.gmra.mxu0 %v1444
        %v1517 = vpop.f32.mrf.mxu0
        %v1518 = vadd.f32 0.0, %v1517
        %v1519 = vpop.f32.mrf.mxu0
        %1520 = vdwg.mxu0
        %v1521 = vadd.f32 %v1430, %v1513
        %v1522 = vadd.f32 %v1431, %v1518
        %s1523 = scalar_lea.vmem [#allocation3], 6
        %v1524 = vld [vmem:[%s1523] ss:$2 sm:$0xff]
        %s1525 = scalar_lea.vmem [#allocation3], 22
        %v1526 = vld [vmem:[%s1525] ss:$2 sm:$0xf]
        %v1527 = vld [vmem:[%s1 + $0xe8] sm:$0xff]
        %v1528 = vld [vmem:[%s1 + $0xf0] sm:$0xff]
        %v1529 = vld [vmem:[%s1 + $0xf8] sm:$0xff]
        %v1530 = vld [vmem:[%s1 + $0x100] sm:$0xff]
        %v1532 = vsel %vm976, %v1524, 0
        %v1535 = vsel %vm976, %v1526, 0
        %1537 = vmatprep.subr.mxu0 0.0
        %1538 = vmatpush1.msra.mxu0 0.0
        %1539 = vmatprep.subr.mxu0 0.0
        %1540 = vmatpush1.msra.mxu0 0.0
        %1541 = vmatprep.subr.mxu0 0.0
        %1542 = vmatpush1.msra.mxu0 0.0
        %1543 = vmatprep.subr.mxu0 0.0
        %1544 = vmatpush1.msra.mxu0 0.0
        %1545 = vmatprep.subr.mxu0 0.0
        %1546 = vmatpush1.msra.mxu0 0.0
        %1547 = vmatprep.subr.mxu0 0.0
        %1548 = vmatpush1.msra.mxu0 0.0
        %1549 = vmatprep.subr.mxu0 0.0
        %1550 = vmatpush1.msra.mxu0 0.0
        %1551 = vmatprep.subr.mxu0 0.0
        %1552 = vmatpush1.msra.mxu0 0.0
        %1553 = vmatprep.subr.mxu0 0.0
        %1554 = vmatpush1.msra.mxu0 0.0
        %1555 = vmatprep.subr.mxu0 0.0
        %1556 = vmatpush1.msra.mxu0 0.0
        %1557 = vmatprep.subr.mxu0 0.0
        %1558 = vmatpush1.msra.mxu0 0.0
        %1559 = vmatprep.subr.mxu0 0.0
        %1560 = vmatpush1.msra.mxu0 0.0
        %1561 = vmatprep.subr.mxu0 0.0
        %1562 = vmatpush1.msra.mxu0 %v1530
        %1563 = vmatprep.subr.mxu0 0.0
        %1564 = vmatpush1.msra.mxu0 %v1529
        %1565 = vmatprep.subr.mxu0 0.0
        %1566 = vmatpush1.msra.mxu0 %v1528
        %1567 = vmatprep.subr.mxu0 0.0
        %1568 = vmatpush1.msra.mxu0 %v1527
        %1569 = vmatprep.subr.mxu0 0.0
        %1570 = vmatpush2.msra.mxu0 0.0
        %1571 = vmatprep.subr.mxu0 0.0
        %1572 = vmatpush2.msra.mxu0 0.0
        %1573 = vmatprep.subr.mxu0 0.0
        %1574 = vmatpush2.msra.mxu0 0.0
        %1575 = vmatprep.subr.mxu0 0.0
        %1576 = vmatpush2.msra.mxu0 0.0
        %1577 = vmatprep.subr.mxu0 0.0
        %1578 = vmatpush2.msra.mxu0 0.0
        %1579 = vmatprep.subr.mxu0 0.0
        %1580 = vmatpush2.msra.mxu0 0.0
        %1581 = vmatprep.subr.mxu0 0.0
        %1582 = vmatpush2.msra.mxu0 0.0
        %1583 = vmatprep.subr.mxu0 0.0
        %1584 = vmatpush2.msra.mxu0 0.0
        %1585 = vmatprep.subr.mxu0 0.0
        %1586 = vmatpush2.msra.mxu0 0.0
        %1587 = vmatprep.subr.mxu0 0.0
        %1588 = vmatpush2.msra.mxu0 0.0
        %1589 = vmatprep.subr.mxu0 0.0
        %1590 = vmatpush2.msra.mxu0 0.0
        %1591 = vmatprep.subr.mxu0 0.0
        %1592 = vmatpush2.msra.mxu0 0.0
        %1593 = vmatprep.subr.mxu0 0.0
        %1594 = vmatpush2.msra.mxu0 0.0
        %1595 = vmatprep.subr.mxu0 0.0
        %1596 = vmatpush2.msra.mxu0 0.0
        %1597 = vmatprep.subr.mxu0 0.0
        %1598 = vmatpush2.msra.mxu0 0.0
        %1599 = vmatprep.subr.mxu0 0.0
        %1600 = vmatpush2.msra.mxu0 0.0
        %1601 = vmatprep.mubr.f32.mxu0 0.0
        %1602 = vmatmul.mubr.f32.gmra.mxu0 %v1532
        %v1603 = vpop.f32.mrf.mxu0
        %v1604 = vadd.f32 0.0, %v1603
        %v1605 = vpop.f32.mrf.mxu0
        %1606 = vmatprep.mubr.f32.mxu0 0.0
        %1607 = vmatmul.mubr.f32.gmra.mxu0 %v1535
        %v1608 = vpop.f32.mrf.mxu0
        %v1609 = vadd.f32 0.0, %v1608
        %v1610 = vpop.f32.mrf.mxu0
        %1611 = vdwg.mxu0
        %v1612 = vadd.f32 %v1521, %v1604
        %v1613 = vadd.f32 %v1522, %v1609
        %v1614 = vld [vmem:[%s1 + $0x108] sm:$0x1]
        %v1615 = vlaneseq
        %v1616 = vshrl.u32 %v1615, 7
        %v1617 = vsub.s32 0, %v1616
        %v1618 = vrot.slane %v1614, %v1617
        %v1619 = vadd.f32 %v1612, %v1618
        %v1620 = vadd.f32 %v1613, %v1618
        %v1621 = vmax.f32 %v1619, 0.0
        %v1622 = vmax.f32 %v1620, 0.0
        %1623 = vst.msk [vmem:[#allocation4] sm:$0xff] %vm976, %v1621
        %vm1624 = vcmask 257024
        %1625 = vst.msk [vmem:[#allocation4 + $0x8] sm:$0xf] %vm1624, %v1622
        %v1626 = vld [vmem:[#allocation4] ss:$2 sm:$0x7]
        %v1627 = vld [vmem:[%s1 + $0x110] sm:$0xff]
        %v1628 = vld [vmem:[%s1 + $0x118] sm:$0xff]
        %v1629 = vld [vmem:[%s1 + $0x120] sm:$0xff]
        %v1630 = vld [vmem:[%s1 + $0x128] sm:$0xff]
        %s1631 = scalar_lea.vmem [#allocation4], 1
        %v1632 = vld [vmem:[%s1631] ss:$2 sm:$0x7]
        %v1633 = vld [vmem:[%s1 + $0x130] sm:$0xff]
        %v1634 = vld [vmem:[%s1 + $0x138] sm:$0xff]
        %v1635 = vld [vmem:[%s1 + $0x140] sm:$0xff]
        %v1636 = vld [vmem:[%s1 + $0x148] sm:$0xff]
        %v1638 = vsel %vm976, %v1632, 0
        %1640 = vmatprep.subr.mxu0 0.0
        %1641 = vmatpush1.msra.mxu0 0.0
        %1642 = vmatprep.subr.mxu0 0.0
        %1643 = vmatpush1.msra.mxu0 0.0
        %1644 = vmatprep.subr.mxu0 0.0
        %1645 = vmatpush1.msra.mxu0 0.0
        %1646 = vmatprep.subr.mxu0 0.0
        %1647 = vmatpush1.msra.mxu0 0.0
        %1648 = vmatprep.subr.mxu0 0.0
        %1649 = vmatpush1.msra.mxu0 0.0
        %1650 = vmatprep.subr.mxu0 0.0
        %1651 = vmatpush1.msra.mxu0 0.0
        %1652 = vmatprep.subr.mxu0 0.0
        %1653 = vmatpush1.msra.mxu0 0.0
        %1654 = vmatprep.subr.mxu0 0.0
        %1655 = vmatpush1.msra.mxu0 0.0
        %1656 = vmatprep.subr.mxu0 0.0
        %1657 = vmatpush1.msra.mxu0 0.0
        %1658 = vmatprep.subr.mxu0 0.0
        %1659 = vmatpush1.msra.mxu0 0.0
        %1660 = vmatprep.subr.mxu0 0.0
        %1661 = vmatpush1.msra.mxu0 0.0
        %1662 = vmatprep.subr.mxu0 0.0
        %1663 = vmatpush1.msra.mxu0 0.0
        %1664 = vmatprep.subr.mxu0 0.0
        %1665 = vmatpush1.msra.mxu0 %v1636
        %1666 = vmatprep.subr.mxu0 0.0
        %1667 = vmatpush1.msra.mxu0 %v1635
        %1668 = vmatprep.subr.mxu0 0.0
        %1669 = vmatpush1.msra.mxu0 %v1634
        %1670 = vmatprep.subr.mxu0 0.0
        %1671 = vmatpush1.msra.mxu0 %v1633
        %1672 = vmatprep.subr.mxu0 0.0
        %1673 = vmatpush2.msra.mxu0 0.0
        %1674 = vmatprep.subr.mxu0 0.0
        %1675 = vmatpush2.msra.mxu0 0.0
        %1676 = vmatprep.subr.mxu0 0.0
        %1677 = vmatpush2.msra.mxu0 0.0
        %1678 = vmatprep.subr.mxu0 0.0
        %1679 = vmatpush2.msra.mxu0 0.0
        %1680 = vmatprep.subr.mxu0 0.0
        %1681 = vmatpush2.msra.mxu0 0.0
        %1682 = vmatprep.subr.mxu0 0.0
        %1683 = vmatpush2.msra.mxu0 0.0
        %1684 = vmatprep.subr.mxu0 0.0
        %1685 = vmatpush2.msra.mxu0 0.0
        %1686 = vmatprep.subr.mxu0 0.0
        %1687 = vmatpush2.msra.mxu0 0.0
        %1688 = vmatprep.subr.mxu0 0.0
        %1689 = vmatpush2.msra.mxu0 0.0
        %1690 = vmatprep.subr.mxu0 0.0
        %1691 = vmatpush2.msra.mxu0 0.0
        %1692 = vmatprep.subr.mxu0 0.0
        %1693 = vmatpush2.msra.mxu0 0.0
        %1694 = vmatprep.subr.mxu0 0.0
        %1695 = vmatpush2.msra.mxu0 0.0
        %1696 = vmatprep.subr.mxu0 0.0
        %1697 = vmatpush2.msra.mxu0 0.0
        %1698 = vmatprep.subr.mxu0 0.0
        %1699 = vmatpush2.msra.mxu0 0.0
        %1700 = vmatprep.subr.mxu0 0.0
        %1701 = vmatpush2.msra.mxu0 0.0
        %1702 = vmatprep.subr.mxu0 0.0
        %1703 = vmatpush2.msra.mxu0 0.0
        %1704 = vmatprep.mubr.f32.mxu0 0.0
        %1705 = vmatmul.mubr.f32.gmra.mxu0 %v1638
        %v1706 = vpop.f32.mrf.mxu0
        %v1707 = vadd.f32 0.0, %v1706
        %v1708 = vpop.f32.mrf.mxu0
        %1709 = vdwg.mxu0
        %v1711 = vsel %vm976, %v1626, 0
        %1713 = vmatprep.subr.mxu0 0.0
        %1714 = vmatpush1.msra.mxu0 0.0
        %1715 = vmatprep.subr.mxu0 0.0
        %1716 = vmatpush1.msra.mxu0 0.0
        %1717 = vmatprep.subr.mxu0 0.0
        %1718 = vmatpush1.msra.mxu0 0.0
        %1719 = vmatprep.subr.mxu0 0.0
        %1720 = vmatpush1.msra.mxu0 0.0
        %1721 = vmatprep.subr.mxu0 0.0
        %1722 = vmatpush1.msra.mxu0 0.0
        %1723 = vmatprep.subr.mxu0 0.0
        %1724 = vmatpush1.msra.mxu0 0.0
        %1725 = vmatprep.subr.mxu0 0.0
        %1726 = vmatpush1.msra.mxu0 0.0
        %1727 = vmatprep.subr.mxu0 0.0
        %1728 = vmatpush1.msra.mxu0 0.0
        %1729 = vmatprep.subr.mxu0 0.0
        %1730 = vmatpush1.msra.mxu0 0.0
        %1731 = vmatprep.subr.mxu0 0.0
        %1732 = vmatpush1.msra.mxu0 0.0
        %1733 = vmatprep.subr.mxu0 0.0
        %1734 = vmatpush1.msra.mxu0 0.0
        %1735 = vmatprep.subr.mxu0 0.0
        %1736 = vmatpush1.msra.mxu0 0.0
        %1737 = vmatprep.subr.mxu0 0.0
        %1738 = vmatpush1.msra.mxu0 %v1630
        %1739 = vmatprep.subr.mxu0 0.0
        %1740 = vmatpush1.msra.mxu0 %v1629
        %1741 = vmatprep.subr.mxu0 0.0
        %1742 = vmatpush1.msra.mxu0 %v1628
        %1743 = vmatprep.subr.mxu0 0.0
        %1744 = vmatpush1.msra.mxu0 %v1627
        %1745 = vmatprep.subr.mxu0 0.0
        %1746 = vmatpush2.msra.mxu0 0.0
        %1747 = vmatprep.subr.mxu0 0.0
        %1748 = vmatpush2.msra.mxu0 0.0
        %1749 = vmatprep.subr.mxu0 0.0
        %1750 = vmatpush2.msra.mxu0 0.0
        %1751 = vmatprep.subr.mxu0 0.0
        %1752 = vmatpush2.msra.mxu0 0.0
        %1753 = vmatprep.subr.mxu0 0.0
        %1754 = vmatpush2.msra.mxu0 0.0
        %1755 = vmatprep.subr.mxu0 0.0
        %1756 = vmatpush2.msra.mxu0 0.0
        %1757 = vmatprep.subr.mxu0 0.0
        %1758 = vmatpush2.msra.mxu0 0.0
        %1759 = vmatprep.subr.mxu0 0.0
        %1760 = vmatpush2.msra.mxu0 0.0
        %1761 = vmatprep.subr.mxu0 0.0
        %1762 = vmatpush2.msra.mxu0 0.0
        %1763 = vmatprep.subr.mxu0 0.0
        %1764 = vmatpush2.msra.mxu0 0.0
        %1765 = vmatprep.subr.mxu0 0.0
        %1766 = vmatpush2.msra.mxu0 0.0
        %1767 = vmatprep.subr.mxu0 0.0
        %1768 = vmatpush2.msra.mxu0 0.0
        %1769 = vmatprep.subr.mxu0 0.0
        %1770 = vmatpush2.msra.mxu0 0.0
        %1771 = vmatprep.subr.mxu0 0.0
        %1772 = vmatpush2.msra.mxu0 0.0
        %1773 = vmatprep.subr.mxu0 0.0
        %1774 = vmatpush2.msra.mxu0 0.0
        %1775 = vmatprep.subr.mxu0 0.0
        %1776 = vmatpush2.msra.mxu0 0.0
        %1777 = vmatprep.mubr.f32.mxu0 0.0
        %1778 = vmatmul.mubr.f32.gmra.mxu0 %v1711
        %v1779 = vpop.f32.mrf.mxu0
        %v1780 = vadd.f32 %v1707, %v1779
        %v1781 = vpop.f32.mrf.mxu0
        %1782 = vdwg.mxu0
        %s1783 = scalar_lea.vmem [#allocation4], 2
        %v1784 = vld [vmem:[%s1783] ss:$2 sm:$0x7]
        %v1785 = vld [vmem:[%s1 + $0x150] sm:$0xff]
        %v1786 = vld [vmem:[%s1 + $0x158] sm:$0xff]
        %v1787 = vld [vmem:[%s1 + $0x160] sm:$0xff]
        %v1788 = vld [vmem:[%s1 + $0x168] sm:$0xff]
        %v1790 = vsel %vm976, %v1784, 0
        %1792 = vmatprep.subr.mxu0 0.0
        %1793 = vmatpush1.msra.mxu0 0.0
        %1794 = vmatprep.subr.mxu0 0.0
        %1795 = vmatpush1.msra.mxu0 0.0
        %1796 = vmatprep.subr.mxu0 0.0
        %1797 = vmatpush1.msra.mxu0 0.0
        %1798 = vmatprep.subr.mxu0 0.0
        %1799 = vmatpush1.msra.mxu0 0.0
        %1800 = vmatprep.subr.mxu0 0.0
        %1801 = vmatpush1.msra.mxu0 0.0
        %1802 = vmatprep.subr.mxu0 0.0
        %1803 = vmatpush1.msra.mxu0 0.0
        %1804 = vmatprep.subr.mxu0 0.0
        %1805 = vmatpush1.msra.mxu0 0.0
        %1806 = vmatprep.subr.mxu0 0.0
        %1807 = vmatpush1.msra.mxu0 0.0
        %1808 = vmatprep.subr.mxu0 0.0
        %1809 = vmatpush1.msra.mxu0 0.0
        %1810 = vmatprep.subr.mxu0 0.0
        %1811 = vmatpush1.msra.mxu0 0.0
        %1812 = vmatprep.subr.mxu0 0.0
        %1813 = vmatpush1.msra.mxu0 0.0
        %1814 = vmatprep.subr.mxu0 0.0
        %1815 = vmatpush1.msra.mxu0 0.0
        %1816 = vmatprep.subr.mxu0 0.0
        %1817 = vmatpush1.msra.mxu0 %v1788
        %1818 = vmatprep.subr.mxu0 0.0
        %1819 = vmatpush1.msra.mxu0 %v1787
        %1820 = vmatprep.subr.mxu0 0.0
        %1821 = vmatpush1.msra.mxu0 %v1786
        %1822 = vmatprep.subr.mxu0 0.0
        %1823 = vmatpush1.msra.mxu0 %v1785
        %1824 = vmatprep.subr.mxu0 0.0
        %1825 = vmatpush2.msra.mxu0 0.0
        %1826 = vmatprep.subr.mxu0 0.0
        %1827 = vmatpush2.msra.mxu0 0.0
        %1828 = vmatprep.subr.mxu0 0.0
        %1829 = vmatpush2.msra.mxu0 0.0
        %1830 = vmatprep.subr.mxu0 0.0
        %1831 = vmatpush2.msra.mxu0 0.0
        %1832 = vmatprep.subr.mxu0 0.0
        %1833 = vmatpush2.msra.mxu0 0.0
        %1834 = vmatprep.subr.mxu0 0.0
        %1835 = vmatpush2.msra.mxu0 0.0
        %1836 = vmatprep.subr.mxu0 0.0
        %1837 = vmatpush2.msra.mxu0 0.0
        %1838 = vmatprep.subr.mxu0 0.0
        %1839 = vmatpush2.msra.mxu0 0.0
        %1840 = vmatprep.subr.mxu0 0.0
        %1841 = vmatpush2.msra.mxu0 0.0
        %1842 = vmatprep.subr.mxu0 0.0
        %1843 = vmatpush2.msra.mxu0 0.0
        %1844 = vmatprep.subr.mxu0 0.0
        %1845 = vmatpush2.msra.mxu0 0.0
        %1846 = vmatprep.subr.mxu0 0.0
        %1847 = vmatpush2.msra.mxu0 0.0
        %1848 = vmatprep.subr.mxu0 0.0
        %1849 = vmatpush2.msra.mxu0 0.0
        %1850 = vmatprep.subr.mxu0 0.0
        %1851 = vmatpush2.msra.mxu0 0.0
        %1852 = vmatprep.subr.mxu0 0.0
        %1853 = vmatpush2.msra.mxu0 0.0
        %1854 = vmatprep.subr.mxu0 0.0
        %1855 = vmatpush2.msra.mxu0 0.0
        %1856 = vmatprep.mubr.f32.mxu0 0.0
        %1857 = vmatmul.mubr.f32.gmra.mxu0 %v1790
        %v1858 = vpop.f32.mrf.mxu0
        %v1859 = vadd.f32 0.0, %v1858
        %v1860 = vpop.f32.mrf.mxu0
        %1861 = vdwg.mxu0
        %v1862 = vadd.f32 %v1780, %v1859
        %s1863 = scalar_lea.vmem [#allocation4], 3
        %v1864 = vld [vmem:[%s1863] ss:$2 sm:$0x7]
        %v1865 = vld [vmem:[%s1 + $0x170] sm:$0xff]
        %v1866 = vld [vmem:[%s1 + $0x178] sm:$0xff]
        %v1867 = vld [vmem:[%s1 + $0x180] sm:$0xff]
        %v1868 = vld [vmem:[%s1 + $0x188] sm:$0xff]
        %v1870 = vsel %vm976, %v1864, 0
        %1872 = vmatprep.subr.mxu0 0.0
        %1873 = vmatpush1.msra.mxu0 0.0
        %1874 = vmatprep.subr.mxu0 0.0
        %1875 = vmatpush1.msra.mxu0 0.0
        %1876 = vmatprep.subr.mxu0 0.0
        %1877 = vmatpush1.msra.mxu0 0.0
        %1878 = vmatprep.subr.mxu0 0.0
        %1879 = vmatpush1.msra.mxu0 0.0
        %1880 = vmatprep.subr.mxu0 0.0
        %1881 = vmatpush1.msra.mxu0 0.0
        %1882 = vmatprep.subr.mxu0 0.0
        %1883 = vmatpush1.msra.mxu0 0.0
        %1884 = vmatprep.subr.mxu0 0.0
        %1885 = vmatpush1.msra.mxu0 0.0
        %1886 = vmatprep.subr.mxu0 0.0
        %1887 = vmatpush1.msra.mxu0 0.0
        %1888 = vmatprep.subr.mxu0 0.0
        %1889 = vmatpush1.msra.mxu0 0.0
        %1890 = vmatprep.subr.mxu0 0.0
        %1891 = vmatpush1.msra.mxu0 0.0
        %1892 = vmatprep.subr.mxu0 0.0
        %1893 = vmatpush1.msra.mxu0 0.0
        %1894 = vmatprep.subr.mxu0 0.0
        %1895 = vmatpush1.msra.mxu0 0.0
        %1896 = vmatprep.subr.mxu0 0.0
        %1897 = vmatpush1.msra.mxu0 %v1868
        %1898 = vmatprep.subr.mxu0 0.0
        %1899 = vmatpush1.msra.mxu0 %v1867
        %1900 = vmatprep.subr.mxu0 0.0
        %1901 = vmatpush1.msra.mxu0 %v1866
        %1902 = vmatprep.subr.mxu0 0.0
        %1903 = vmatpush1.msra.mxu0 %v1865
        %1904 = vmatprep.subr.mxu0 0.0
        %1905 = vmatpush2.msra.mxu0 0.0
        %1906 = vmatprep.subr.mxu0 0.0
        %1907 = vmatpush2.msra.mxu0 0.0
        %1908 = vmatprep.subr.mxu0 0.0
        %1909 = vmatpush2.msra.mxu0 0.0
        %1910 = vmatprep.subr.mxu0 0.0
        %1911 = vmatpush2.msra.mxu0 0.0
        %1912 = vmatprep.subr.mxu0 0.0
        %1913 = vmatpush2.msra.mxu0 0.0
        %1914 = vmatprep.subr.mxu0 0.0
        %1915 = vmatpush2.msra.mxu0 0.0
        %1916 = vmatprep.subr.mxu0 0.0
        %1917 = vmatpush2.msra.mxu0 0.0
        %1918 = vmatprep.subr.mxu0 0.0
        %1919 = vmatpush2.msra.mxu0 0.0
        %1920 = vmatprep.subr.mxu0 0.0
        %1921 = vmatpush2.msra.mxu0 0.0
        %1922 = vmatprep.subr.mxu0 0.0
        %1923 = vmatpush2.msra.mxu0 0.0
        %1924 = vmatprep.subr.mxu0 0.0
        %1925 = vmatpush2.msra.mxu0 0.0
        %1926 = vmatprep.subr.mxu0 0.0
        %1927 = vmatpush2.msra.mxu0 0.0
        %1928 = vmatprep.subr.mxu0 0.0
        %1929 = vmatpush2.msra.mxu0 0.0
        %1930 = vmatprep.subr.mxu0 0.0
        %1931 = vmatpush2.msra.mxu0 0.0
        %1932 = vmatprep.subr.mxu0 0.0
        %1933 = vmatpush2.msra.mxu0 0.0
        %1934 = vmatprep.subr.mxu0 0.0
        %1935 = vmatpush2.msra.mxu0 0.0
        %1936 = vmatprep.mubr.f32.mxu0 0.0
        %1937 = vmatmul.mubr.f32.gmra.mxu0 %v1870
        %v1938 = vpop.f32.mrf.mxu0
        %v1939 = vadd.f32 0.0, %v1938
        %v1940 = vpop.f32.mrf.mxu0
        %1941 = vdwg.mxu0
        %v1942 = vadd.f32 %v1862, %v1939
        %s1943 = scalar_lea.vmem [#allocation4], 4
        %v1944 = vld [vmem:[%s1943] ss:$2 sm:$0x7]
        %v1945 = vld [vmem:[%s1 + $0x190] sm:$0xff]
        %v1946 = vld [vmem:[%s1 + $0x198] sm:$0xff]
        %v1947 = vld [vmem:[%s1 + $0x1a0] sm:$0xff]
        %v1948 = vld [vmem:[%s1 + $0x1a8] sm:$0xff]
        %v1950 = vsel %vm976, %v1944, 0
        %1952 = vmatprep.subr.mxu0 0.0
        %1953 = vmatpush1.msra.mxu0 0.0
        %1954 = vmatprep.subr.mxu0 0.0
        %1955 = vmatpush1.msra.mxu0 0.0
        %1956 = vmatprep.subr.mxu0 0.0
        %1957 = vmatpush1.msra.mxu0 0.0
        %1958 = vmatprep.subr.mxu0 0.0
        %1959 = vmatpush1.msra.mxu0 0.0
        %1960 = vmatprep.subr.mxu0 0.0
        %1961 = vmatpush1.msra.mxu0 0.0
        %1962 = vmatprep.subr.mxu0 0.0
        %1963 = vmatpush1.msra.mxu0 0.0
        %1964 = vmatprep.subr.mxu0 0.0
        %1965 = vmatpush1.msra.mxu0 0.0
        %1966 = vmatprep.subr.mxu0 0.0
        %1967 = vmatpush1.msra.mxu0 0.0
        %1968 = vmatprep.subr.mxu0 0.0
        %1969 = vmatpush1.msra.mxu0 0.0
        %1970 = vmatprep.subr.mxu0 0.0
        %1971 = vmatpush1.msra.mxu0 0.0
        %1972 = vmatprep.subr.mxu0 0.0
        %1973 = vmatpush1.msra.mxu0 0.0
        %1974 = vmatprep.subr.mxu0 0.0
        %1975 = vmatpush1.msra.mxu0 0.0
        %1976 = vmatprep.subr.mxu0 0.0
        %1977 = vmatpush1.msra.mxu0 %v1948
        %1978 = vmatprep.subr.mxu0 0.0
        %1979 = vmatpush1.msra.mxu0 %v1947
        %1980 = vmatprep.subr.mxu0 0.0
        %1981 = vmatpush1.msra.mxu0 %v1946
        %1982 = vmatprep.subr.mxu0 0.0
        %1983 = vmatpush1.msra.mxu0 %v1945
        %1984 = vmatprep.subr.mxu0 0.0
        %1985 = vmatpush2.msra.mxu0 0.0
        %1986 = vmatprep.subr.mxu0 0.0
        %1987 = vmatpush2.msra.mxu0 0.0
        %1988 = vmatprep.subr.mxu0 0.0
        %1989 = vmatpush2.msra.mxu0 0.0
        %1990 = vmatprep.subr.mxu0 0.0
        %1991 = vmatpush2.msra.mxu0 0.0
        %1992 = vmatprep.subr.mxu0 0.0
        %1993 = vmatpush2.msra.mxu0 0.0
        %1994 = vmatprep.subr.mxu0 0.0
        %1995 = vmatpush2.msra.mxu0 0.0
        %1996 = vmatprep.subr.mxu0 0.0
        %1997 = vmatpush2.msra.mxu0 0.0
        %1998 = vmatprep.subr.mxu0 0.0
        %1999 = vmatpush2.msra.mxu0 0.0
        %2000 = vmatprep.subr.mxu0 0.0
        %2001 = vmatpush2.msra.mxu0 0.0
        %2002 = vmatprep.subr.mxu0 0.0
        %2003 = vmatpush2.msra.mxu0 0.0
        %2004 = vmatprep.subr.mxu0 0.0
        %2005 = vmatpush2.msra.mxu0 0.0
        %2006 = vmatprep.subr.mxu0 0.0
        %2007 = vmatpush2.msra.mxu0 0.0
        %2008 = vmatprep.subr.mxu0 0.0
        %2009 = vmatpush2.msra.mxu0 0.0
        %2010 = vmatprep.subr.mxu0 0.0
        %2011 = vmatpush2.msra.mxu0 0.0
        %2012 = vmatprep.subr.mxu0 0.0
        %2013 = vmatpush2.msra.mxu0 0.0
        %2014 = vmatprep.subr.mxu0 0.0
        %2015 = vmatpush2.msra.mxu0 0.0
        %2016 = vmatprep.mubr.f32.mxu0 0.0
        %2017 = vmatmul.mubr.f32.gmra.mxu0 %v1950
        %v2018 = vpop.f32.mrf.mxu0
        %v2019 = vadd.f32 0.0, %v2018
        %v2020 = vpop.f32.mrf.mxu0
        %2021 = vdwg.mxu0
        %v2022 = vadd.f32 %v1942, %v2019
        %s2023 = scalar_lea.vmem [#allocation4], 5
        %v2024 = vld [vmem:[%s2023] ss:$2 sm:$0x7]
        %v2025 = vld [vmem:[%s1 + $0x1b0] sm:$0xff]
        %v2026 = vld [vmem:[%s1 + $0x1b8] sm:$0xff]
        %v2027 = vld [vmem:[%s1 + $0x1c0] sm:$0xff]
        %v2028 = vld [vmem:[%s1 + $0x1c8] sm:$0xff]
        %v2030 = vsel %vm976, %v2024, 0
        %2032 = vmatprep.subr.mxu0 0.0
        %2033 = vmatpush1.msra.mxu0 0.0
        %2034 = vmatprep.subr.mxu0 0.0
        %2035 = vmatpush1.msra.mxu0 0.0
        %2036 = vmatprep.subr.mxu0 0.0
        %2037 = vmatpush1.msra.mxu0 0.0
        %2038 = vmatprep.subr.mxu0 0.0
        %2039 = vmatpush1.msra.mxu0 0.0
        %2040 = vmatprep.subr.mxu0 0.0
        %2041 = vmatpush1.msra.mxu0 0.0
        %2042 = vmatprep.subr.mxu0 0.0
        %2043 = vmatpush1.msra.mxu0 0.0
        %2044 = vmatprep.subr.mxu0 0.0
        %2045 = vmatpush1.msra.mxu0 0.0
        %2046 = vmatprep.subr.mxu0 0.0
        %2047 = vmatpush1.msra.mxu0 0.0
        %2048 = vmatprep.subr.mxu0 0.0
        %2049 = vmatpush1.msra.mxu0 0.0
        %2050 = vmatprep.subr.mxu0 0.0
        %2051 = vmatpush1.msra.mxu0 0.0
        %2052 = vmatprep.subr.mxu0 0.0
        %2053 = vmatpush1.msra.mxu0 0.0
        %2054 = vmatprep.subr.mxu0 0.0
        %2055 = vmatpush1.msra.mxu0 0.0
        %2056 = vmatprep.subr.mxu0 0.0
        %2057 = vmatpush1.msra.mxu0 %v2028
        %2058 = vmatprep.subr.mxu0 0.0
        %2059 = vmatpush1.msra.mxu0 %v2027
        %2060 = vmatprep.subr.mxu0 0.0
        %2061 = vmatpush1.msra.mxu0 %v2026
        %2062 = vmatprep.subr.mxu0 0.0
        %2063 = vmatpush1.msra.mxu0 %v2025
        %2064 = vmatprep.subr.mxu0 0.0
        %2065 = vmatpush2.msra.mxu0 0.0
        %2066 = vmatprep.subr.mxu0 0.0
        %2067 = vmatpush2.msra.mxu0 0.0
        %2068 = vmatprep.subr.mxu0 0.0
        %2069 = vmatpush2.msra.mxu0 0.0
        %2070 = vmatprep.subr.mxu0 0.0
        %2071 = vmatpush2.msra.mxu0 0.0
        %2072 = vmatprep.subr.mxu0 0.0
        %2073 = vmatpush2.msra.mxu0 0.0
        %2074 = vmatprep.subr.mxu0 0.0
        %2075 = vmatpush2.msra.mxu0 0.0
        %2076 = vmatprep.subr.mxu0 0.0
        %2077 = vmatpush2.msra.mxu0 0.0
        %2078 = vmatprep.subr.mxu0 0.0
        %2079 = vmatpush2.msra.mxu0 0.0
        %2080 = vmatprep.subr.mxu0 0.0
        %2081 = vmatpush2.msra.mxu0 0.0
        %2082 = vmatprep.subr.mxu0 0.0
        %2083 = vmatpush2.msra.mxu0 0.0
        %2084 = vmatprep.subr.mxu0 0.0
        %2085 = vmatpush2.msra.mxu0 0.0
        %2086 = vmatprep.subr.mxu0 0.0
        %2087 = vmatpush2.msra.mxu0 0.0
        %2088 = vmatprep.subr.mxu0 0.0
        %2089 = vmatpush2.msra.mxu0 0.0
        %2090 = vmatprep.subr.mxu0 0.0
        %2091 = vmatpush2.msra.mxu0 0.0
        %2092 = vmatprep.subr.mxu0 0.0
        %2093 = vmatpush2.msra.mxu0 0.0
        %2094 = vmatprep.subr.mxu0 0.0
        %2095 = vmatpush2.msra.mxu0 0.0
        %2096 = vmatprep.mubr.f32.mxu0 0.0
        %2097 = vmatmul.mubr.f32.gmra.mxu0 %v2030
        %v2098 = vpop.f32.mrf.mxu0
        %v2099 = vadd.f32 0.0, %v2098
        %v2100 = vpop.f32.mrf.mxu0
        %2101 = vdwg.mxu0
        %v2102 = vadd.f32 %v2022, %v2099
        %s2103 = scalar_lea.vmem [#allocation4], 6
        %v2104 = vld [vmem:[%s2103] ss:$2 sm:$0x7]
        %v2105 = vld [vmem:[%s1 + $0x1d0] sm:$0xff]
        %v2106 = vld [vmem:[%s1 + $0x1d8] sm:$0xff]
        %v2107 = vld [vmem:[%s1 + $0x1e0] sm:$0xff]
        %v2108 = vld [vmem:[%s1 + $0x1e8] sm:$0xff]
        %v2110 = vsel %vm976, %v2104, 0
        %2112 = vmatprep.subr.mxu0 0.0
        %2113 = vmatpush1.msra.mxu0 0.0
        %2114 = vmatprep.subr.mxu0 0.0
        %2115 = vmatpush1.msra.mxu0 0.0
        %2116 = vmatprep.subr.mxu0 0.0
        %2117 = vmatpush1.msra.mxu0 0.0
        %2118 = vmatprep.subr.mxu0 0.0
        %2119 = vmatpush1.msra.mxu0 0.0
        %2120 = vmatprep.subr.mxu0 0.0
        %2121 = vmatpush1.msra.mxu0 0.0
        %2122 = vmatprep.subr.mxu0 0.0
        %2123 = vmatpush1.msra.mxu0 0.0
        %2124 = vmatprep.subr.mxu0 0.0
        %2125 = vmatpush1.msra.mxu0 0.0
        %2126 = vmatprep.subr.mxu0 0.0
        %2127 = vmatpush1.msra.mxu0 0.0
        %2128 = vmatprep.subr.mxu0 0.0
        %2129 = vmatpush1.msra.mxu0 0.0
        %2130 = vmatprep.subr.mxu0 0.0
        %2131 = vmatpush1.msra.mxu0 0.0
        %2132 = vmatprep.subr.mxu0 0.0
        %2133 = vmatpush1.msra.mxu0 0.0
        %2134 = vmatprep.subr.mxu0 0.0
        %2135 = vmatpush1.msra.mxu0 0.0
        %2136 = vmatprep.subr.mxu0 0.0
        %2137 = vmatpush1.msra.mxu0 %v2108
        %2138 = vmatprep.subr.mxu0 0.0
        %2139 = vmatpush1.msra.mxu0 %v2107
        %2140 = vmatprep.subr.mxu0 0.0
        %2141 = vmatpush1.msra.mxu0 %v2106
        %2142 = vmatprep.subr.mxu0 0.0
        %2143 = vmatpush1.msra.mxu0 %v2105
        %2144 = vmatprep.subr.mxu0 0.0
        %2145 = vmatpush2.msra.mxu0 0.0
        %2146 = vmatprep.subr.mxu0 0.0
        %2147 = vmatpush2.msra.mxu0 0.0
        %2148 = vmatprep.subr.mxu0 0.0
        %2149 = vmatpush2.msra.mxu0 0.0
        %2150 = vmatprep.subr.mxu0 0.0
        %2151 = vmatpush2.msra.mxu0 0.0
        %2152 = vmatprep.subr.mxu0 0.0
        %2153 = vmatpush2.msra.mxu0 0.0
        %2154 = vmatprep.subr.mxu0 0.0
        %2155 = vmatpush2.msra.mxu0 0.0
        %2156 = vmatprep.subr.mxu0 0.0
        %2157 = vmatpush2.msra.mxu0 0.0
        %2158 = vmatprep.subr.mxu0 0.0
        %2159 = vmatpush2.msra.mxu0 0.0
        %2160 = vmatprep.subr.mxu0 0.0
        %2161 = vmatpush2.msra.mxu0 0.0
        %2162 = vmatprep.subr.mxu0 0.0
        %2163 = vmatpush2.msra.mxu0 0.0
        %2164 = vmatprep.subr.mxu0 0.0
        %2165 = vmatpush2.msra.mxu0 0.0
        %2166 = vmatprep.subr.mxu0 0.0
        %2167 = vmatpush2.msra.mxu0 0.0
        %2168 = vmatprep.subr.mxu0 0.0
        %2169 = vmatpush2.msra.mxu0 0.0
        %2170 = vmatprep.subr.mxu0 0.0
        %2171 = vmatpush2.msra.mxu0 0.0
        %2172 = vmatprep.subr.mxu0 0.0
        %2173 = vmatpush2.msra.mxu0 0.0
        %2174 = vmatprep.subr.mxu0 0.0
        %2175 = vmatpush2.msra.mxu0 0.0
        %2176 = vmatprep.mubr.f32.mxu0 0.0
        %2177 = vmatmul.mubr.f32.gmra.mxu0 %v2110
        %v2178 = vpop.f32.mrf.mxu0
        %v2179 = vadd.f32 0.0, %v2178
        %v2180 = vpop.f32.mrf.mxu0
        %2181 = vdwg.mxu0
        %v2182 = vadd.f32 %v2102, %v2179
        %v2183 = vld [vmem:[%s1 + $0x1f0] sm:$0x1]
        %v2184 = vlaneseq
        %v2185 = vshrl.u32 %v2184, 7
        %v2186 = vsub.s32 0, %v2185
        %v2187 = vrot.slane %v2183, %v2186
        %v2188 = vadd.f32 %v2182, %v2187
        %v2189 = vmax.f32 %v2188, 0.0
        %v2190 = vld [vmem:[%s1 + $0x258] sm:$0x1]
        %v2191 = vld [vmem:[%s1 + $0x1f8] sm:$0xff]
        %v2192 = vld [vmem:[%s1 + $0x200] sm:$0xff]
        %v2193 = vld [vmem:[%s1 + $0x208] sm:$0xff]
        %v2194 = vld [vmem:[%s1 + $0x210] sm:$0xff]
        %v2196 = vsel %vm976, %v2189, 0
        %2198 = vmatprep.subr.mxu0 0.0
        %2199 = vmatpush1.msra.mxu0 0.0
        %2200 = vmatprep.subr.mxu0 0.0
        %2201 = vmatpush1.msra.mxu0 0.0
        %2202 = vmatprep.subr.mxu0 0.0
        %2203 = vmatpush1.msra.mxu0 0.0
        %2204 = vmatprep.subr.mxu0 0.0
        %2205 = vmatpush1.msra.mxu0 0.0
        %2206 = vmatprep.subr.mxu0 0.0
        %2207 = vmatpush1.msra.mxu0 0.0
        %2208 = vmatprep.subr.mxu0 0.0
        %2209 = vmatpush1.msra.mxu0 0.0
        %2210 = vmatprep.subr.mxu0 0.0
        %2211 = vmatpush1.msra.mxu0 0.0
        %2212 = vmatprep.subr.mxu0 0.0
        %2213 = vmatpush1.msra.mxu0 0.0
        %2214 = vmatprep.subr.mxu0 0.0
        %2215 = vmatpush1.msra.mxu0 0.0
        %2216 = vmatprep.subr.mxu0 0.0
        %2217 = vmatpush1.msra.mxu0 0.0
        %2218 = vmatprep.subr.mxu0 0.0
        %2219 = vmatpush1.msra.mxu0 0.0
        %2220 = vmatprep.subr.mxu0 0.0
        %2221 = vmatpush1.msra.mxu0 0.0
        %2222 = vmatprep.subr.mxu0 0.0
        %2223 = vmatpush1.msra.mxu0 %v2194
        %2224 = vmatprep.subr.mxu0 0.0
        %2225 = vmatpush1.msra.mxu0 %v2193
        %2226 = vmatprep.subr.mxu0 0.0
        %2227 = vmatpush1.msra.mxu0 %v2192
        %2228 = vmatprep.subr.mxu0 0.0
        %2229 = vmatpush1.msra.mxu0 %v2191
        %2230 = vmatprep.subr.mxu0 0.0
        %2231 = vmatpush2.msra.mxu0 0.0
        %2232 = vmatprep.subr.mxu0 0.0
        %2233 = vmatpush2.msra.mxu0 0.0
        %2234 = vmatprep.subr.mxu0 0.0
        %2235 = vmatpush2.msra.mxu0 0.0
        %2236 = vmatprep.subr.mxu0 0.0
        %2237 = vmatpush2.msra.mxu0 0.0
        %2238 = vmatprep.subr.mxu0 0.0
        %2239 = vmatpush2.msra.mxu0 0.0
        %2240 = vmatprep.subr.mxu0 0.0
        %2241 = vmatpush2.msra.mxu0 0.0
        %2242 = vmatprep.subr.mxu0 0.0
        %2243 = vmatpush2.msra.mxu0 0.0
        %2244 = vmatprep.subr.mxu0 0.0
        %2245 = vmatpush2.msra.mxu0 0.0
        %2246 = vmatprep.subr.mxu0 0.0
        %2247 = vmatpush2.msra.mxu0 0.0
        %2248 = vmatprep.subr.mxu0 0.0
        %2249 = vmatpush2.msra.mxu0 0.0
        %2250 = vmatprep.subr.mxu0 0.0
        %2251 = vmatpush2.msra.mxu0 0.0
        %2252 = vmatprep.subr.mxu0 0.0
        %2253 = vmatpush2.msra.mxu0 0.0
        %2254 = vmatprep.subr.mxu0 0.0
        %2255 = vmatpush2.msra.mxu0 0.0
        %2256 = vmatprep.subr.mxu0 0.0
        %2257 = vmatpush2.msra.mxu0 0.0
        %2258 = vmatprep.subr.mxu0 0.0
        %2259 = vmatpush2.msra.mxu0 0.0
        %2260 = vmatprep.subr.mxu0 0.0
        %2261 = vmatpush2.msra.mxu0 0.0
        %2262 = vmatprep.mubr.f32.mxu0 0.0
        %2263 = vmatmul.mubr.f32.gmra.mxu0 %v2196
        %v2264 = vpop.f32.mrf.mxu0
        %v2265 = vadd.f32 0.0, %v2264
        %v2266 = vpop.f32.mrf.mxu0
        %2267 = vdwg.mxu0
        %v2268 = vadd.f32 %v2190, %v2265
        %v2269 = vld [vmem:[%s1 + $0x218] sm:$0xff]
        %v2270 = vld [vmem:[%s1 + $0x220] sm:$0xff]
        %v2271 = vld [vmem:[%s1 + $0x228] sm:$0xff]
        %v2272 = vld [vmem:[%s1 + $0x230] sm:$0xff]
        %v2273 = vrot.slane %v2189, 1
        %v2274 = vsel %vm976, %v2273, 0
        %2276 = vmatprep.subr.mxu0 0.0
        %2277 = vmatpush1.msra.mxu0 0.0
        %2278 = vmatprep.subr.mxu0 0.0
        %2279 = vmatpush1.msra.mxu0 0.0
        %2280 = vmatprep.subr.mxu0 0.0
        %2281 = vmatpush1.msra.mxu0 0.0
        %2282 = vmatprep.subr.mxu0 0.0
        %2283 = vmatpush1.msra.mxu0 0.0
        %2284 = vmatprep.subr.mxu0 0.0
        %2285 = vmatpush1.msra.mxu0 0.0
        %2286 = vmatprep.subr.mxu0 0.0
        %2287 = vmatpush1.msra.mxu0 0.0
        %2288 = vmatprep.subr.mxu0 0.0
        %2289 = vmatpush1.msra.mxu0 0.0
        %2290 = vmatprep.subr.mxu0 0.0
        %2291 = vmatpush1.msra.mxu0 0.0
        %2292 = vmatprep.subr.mxu0 0.0
        %2293 = vmatpush1.msra.mxu0 0.0
        %2294 = vmatprep.subr.mxu0 0.0
        %2295 = vmatpush1.msra.mxu0 0.0
        %2296 = vmatprep.subr.mxu0 0.0
        %2297 = vmatpush1.msra.mxu0 0.0
        %2298 = vmatprep.subr.mxu0 0.0
        %2299 = vmatpush1.msra.mxu0 0.0
        %2300 = vmatprep.subr.mxu0 0.0
        %2301 = vmatpush1.msra.mxu0 %v2272
        %2302 = vmatprep.subr.mxu0 0.0
        %2303 = vmatpush1.msra.mxu0 %v2271
        %2304 = vmatprep.subr.mxu0 0.0
        %2305 = vmatpush1.msra.mxu0 %v2270
        %2306 = vmatprep.subr.mxu0 0.0
        %2307 = vmatpush1.msra.mxu0 %v2269
        %2308 = vmatprep.subr.mxu0 0.0
        %2309 = vmatpush2.msra.mxu0 0.0
        %2310 = vmatprep.subr.mxu0 0.0
        %2311 = vmatpush2.msra.mxu0 0.0
        %2312 = vmatprep.subr.mxu0 0.0
        %2313 = vmatpush2.msra.mxu0 0.0
        %2314 = vmatprep.subr.mxu0 0.0
        %2315 = vmatpush2.msra.mxu0 0.0
        %2316 = vmatprep.subr.mxu0 0.0
        %2317 = vmatpush2.msra.mxu0 0.0
        %2318 = vmatprep.subr.mxu0 0.0
        %2319 = vmatpush2.msra.mxu0 0.0
        %2320 = vmatprep.subr.mxu0 0.0
        %2321 = vmatpush2.msra.mxu0 0.0
        %2322 = vmatprep.subr.mxu0 0.0
        %2323 = vmatpush2.msra.mxu0 0.0
        %2324 = vmatprep.subr.mxu0 0.0
        %2325 = vmatpush2.msra.mxu0 0.0
        %2326 = vmatprep.subr.mxu0 0.0
        %2327 = vmatpush2.msra.mxu0 0.0
        %2328 = vmatprep.subr.mxu0 0.0
        %2329 = vmatpush2.msra.mxu0 0.0
        %2330 = vmatprep.subr.mxu0 0.0
        %2331 = vmatpush2.msra.mxu0 0.0
        %2332 = vmatprep.subr.mxu0 0.0
        %2333 = vmatpush2.msra.mxu0 0.0
        %2334 = vmatprep.subr.mxu0 0.0
        %2335 = vmatpush2.msra.mxu0 0.0
        %2336 = vmatprep.subr.mxu0 0.0
        %2337 = vmatpush2.msra.mxu0 0.0
        %2338 = vmatprep.subr.mxu0 0.0
        %2339 = vmatpush2.msra.mxu0 0.0
        %2340 = vmatprep.mubr.f32.mxu0 0.0
        %2341 = vmatmul.mubr.f32.gmra.mxu0 %v2274
        %v2342 = vpop.f32.mrf.mxu0
        %v2343 = vadd.f32 0.0, %v2342
        %v2344 = vpop.f32.mrf.mxu0
        %2345 = vdwg.mxu0
        %v2346 = vadd.f32 %v2268, %v2343
        %v2347 = vld [vmem:[%s1 + $0x238] sm:$0xff]
        %v2348 = vld [vmem:[%s1 + $0x240] sm:$0xff]
        %v2349 = vld [vmem:[%s1 + $0x248] sm:$0xff]
        %v2350 = vld [vmem:[%s1 + $0x250] sm:$0xff]
        %v2351 = vrot.slane %v2189, 2
        %v2352 = vsel %vm976, %v2351, 0
        %2354 = vmatprep.subr.mxu0 0.0
        %2355 = vmatpush1.msra.mxu0 0.0
        %2356 = vmatprep.subr.mxu0 0.0
        %2357 = vmatpush1.msra.mxu0 0.0
        %2358 = vmatprep.subr.mxu0 0.0
        %2359 = vmatpush1.msra.mxu0 0.0
        %2360 = vmatprep.subr.mxu0 0.0
        %2361 = vmatpush1.msra.mxu0 0.0
        %2362 = vmatprep.subr.mxu0 0.0
        %2363 = vmatpush1.msra.mxu0 0.0
        %2364 = vmatprep.subr.mxu0 0.0
        %2365 = vmatpush1.msra.mxu0 0.0
        %2366 = vmatprep.subr.mxu0 0.0
        %2367 = vmatpush1.msra.mxu0 0.0
        %2368 = vmatprep.subr.mxu0 0.0
        %2369 = vmatpush1.msra.mxu0 0.0
        %2370 = vmatprep.subr.mxu0 0.0
        %2371 = vmatpush1.msra.mxu0 0.0
        %2372 = vmatprep.subr.mxu0 0.0
        %2373 = vmatpush1.msra.mxu0 0.0
        %2374 = vmatprep.subr.mxu0 0.0
        %2375 = vmatpush1.msra.mxu0 0.0
        %2376 = vmatprep.subr.mxu0 0.0
        %2377 = vmatpush1.msra.mxu0 0.0
        %2378 = vmatprep.subr.mxu0 0.0
        %2379 = vmatpush1.msra.mxu0 %v2350
        %2380 = vmatprep.subr.mxu0 0.0
        %2381 = vmatpush1.msra.mxu0 %v2349
        %2382 = vmatprep.subr.mxu0 0.0
        %2383 = vmatpush1.msra.mxu0 %v2348
        %2384 = vmatprep.subr.mxu0 0.0
        %2385 = vmatpush1.msra.mxu0 %v2347
        %2386 = vmatprep.subr.mxu0 0.0
        %2387 = vmatpush2.msra.mxu0 0.0
        %2388 = vmatprep.subr.mxu0 0.0
        %2389 = vmatpush2.msra.mxu0 0.0
        %2390 = vmatprep.subr.mxu0 0.0
        %2391 = vmatpush2.msra.mxu0 0.0
        %2392 = vmatprep.subr.mxu0 0.0
        %2393 = vmatpush2.msra.mxu0 0.0
        %2394 = vmatprep.subr.mxu0 0.0
        %2395 = vmatpush2.msra.mxu0 0.0
        %2396 = vmatprep.subr.mxu0 0.0
        %2397 = vmatpush2.msra.mxu0 0.0
        %2398 = vmatprep.subr.mxu0 0.0
        %2399 = vmatpush2.msra.mxu0 0.0
        %2400 = vmatprep.subr.mxu0 0.0
        %2401 = vmatpush2.msra.mxu0 0.0
        %2402 = vmatprep.subr.mxu0 0.0
        %2403 = vmatpush2.msra.mxu0 0.0
        %2404 = vmatprep.subr.mxu0 0.0
        %2405 = vmatpush2.msra.mxu0 0.0
        %2406 = vmatprep.subr.mxu0 0.0
        %2407 = vmatpush2.msra.mxu0 0.0
        %2408 = vmatprep.subr.mxu0 0.0
        %2409 = vmatpush2.msra.mxu0 0.0
        %2410 = vmatprep.subr.mxu0 0.0
        %2411 = vmatpush2.msra.mxu0 0.0
        %2412 = vmatprep.subr.mxu0 0.0
        %2413 = vmatpush2.msra.mxu0 0.0
        %2414 = vmatprep.subr.mxu0 0.0
        %2415 = vmatpush2.msra.mxu0 0.0
        %2416 = vmatprep.subr.mxu0 0.0
        %2417 = vmatpush2.msra.mxu0 0.0
        %2418 = vmatprep.mubr.f32.mxu0 0.0
        %2419 = vmatmul.mubr.f32.gmra.mxu0 %v2352
        %v2420 = vpop.f32.mrf.mxu0
        %v2421 = vadd.f32 0.0, %v2420
        %v2422 = vpop.f32.mrf.mxu0
        %2423 = vdwg.mxu0
        %v2424 = vadd.f32 %v2346, %v2421
        %v2425 = vld [vmem:[%s1 + $0x260] sm:$0xff]
        %v2426 = vld [vmem:[%s1 + $0x268] sm:$0xff]
        %v2427 = vld [vmem:[%s1 + $0x270] sm:$0xff]
        %v2428 = vld [vmem:[%s1 + $0x278] sm:$0xff]
        %v2429 = vld [vmem:[%s1 + $0x280] sm:$0x1]
        %v2431 = vsel %vm976, %v2424, 0
        %2433 = vmatprep.subr.mxu0 0.0
        %2434 = vmatpush1.msra.mxu0 0.0
        %2435 = vmatprep.subr.mxu0 0.0
        %2436 = vmatpush1.msra.mxu0 0.0
        %2437 = vmatprep.subr.mxu0 0.0
        %2438 = vmatpush1.msra.mxu0 0.0
        %2439 = vmatprep.subr.mxu0 0.0
        %2440 = vmatpush1.msra.mxu0 0.0
        %2441 = vmatprep.subr.mxu0 0.0
        %2442 = vmatpush1.msra.mxu0 0.0
        %2443 = vmatprep.subr.mxu0 0.0
        %2444 = vmatpush1.msra.mxu0 0.0
        %2445 = vmatprep.subr.mxu0 0.0
        %2446 = vmatpush1.msra.mxu0 0.0
        %2447 = vmatprep.subr.mxu0 0.0
        %2448 = vmatpush1.msra.mxu0 0.0
        %2449 = vmatprep.subr.mxu0 0.0
        %2450 = vmatpush1.msra.mxu0 0.0
        %2451 = vmatprep.subr.mxu0 0.0
        %2452 = vmatpush1.msra.mxu0 0.0
        %2453 = vmatprep.subr.mxu0 0.0
        %2454 = vmatpush1.msra.mxu0 0.0
        %2455 = vmatprep.subr.mxu0 0.0
        %2456 = vmatpush1.msra.mxu0 0.0
        %2457 = vmatprep.subr.mxu0 0.0
        %2458 = vmatpush1.msra.mxu0 %v2428
        %2459 = vmatprep.subr.mxu0 0.0
        %2460 = vmatpush1.msra.mxu0 %v2427
        %2461 = vmatprep.subr.mxu0 0.0
        %2462 = vmatpush1.msra.mxu0 %v2426
        %2463 = vmatprep.subr.mxu0 0.0
        %2464 = vmatpush1.msra.mxu0 %v2425
        %2465 = vmatprep.subr.mxu0 0.0
        %2466 = vmatpush2.msra.mxu0 0.0
        %2467 = vmatprep.subr.mxu0 0.0
        %2468 = vmatpush2.msra.mxu0 0.0
        %2469 = vmatprep.subr.mxu0 0.0
        %2470 = vmatpush2.msra.mxu0 0.0
        %2471 = vmatprep.subr.mxu0 0.0
        %2472 = vmatpush2.msra.mxu0 0.0
        %2473 = vmatprep.subr.mxu0 0.0
        %2474 = vmatpush2.msra.mxu0 0.0
        %2475 = vmatprep.subr.mxu0 0.0
        %2476 = vmatpush2.msra.mxu0 0.0
        %2477 = vmatprep.subr.mxu0 0.0
        %2478 = vmatpush2.msra.mxu0 0.0
        %2479 = vmatprep.subr.mxu0 0.0
        %2480 = vmatpush2.msra.mxu0 0.0
        %2481 = vmatprep.subr.mxu0 0.0
        %2482 = vmatpush2.msra.mxu0 0.0
        %2483 = vmatprep.subr.mxu0 0.0
        %2484 = vmatpush2.msra.mxu0 0.0
        %2485 = vmatprep.subr.mxu0 0.0
        %2486 = vmatpush2.msra.mxu0 0.0
        %2487 = vmatprep.subr.mxu0 0.0
        %2488 = vmatpush2.msra.mxu0 0.0
        %2489 = vmatprep.subr.mxu0 0.0
        %2490 = vmatpush2.msra.mxu0 0.0
        %2491 = vmatprep.subr.mxu0 0.0
        %2492 = vmatpush2.msra.mxu0 0.0
        %2493 = vmatprep.subr.mxu0 0.0
        %2494 = vmatpush2.msra.mxu0 0.0
        %2495 = vmatprep.subr.mxu0 0.0
        %2496 = vmatpush2.msra.mxu0 0.0
        %2497 = vmatprep.mubr.f32.mxu0 0.0
        %2498 = vmatmul.mubr.f32.gmra.mxu0 %v2431
        %v2499 = vpop.f32.mrf.mxu0
        %v2500 = vadd.f32 %v2429, %v2499
        %v2501 = vpop.f32.mrf.mxu0
        %2502 = vdwg.mxu0
        %vm2503 = vcmask 16384
        %2504 = vst.msk [vmem:[%s133] sm:$0x1] %vm2503, %v2500
        %s2505 = sand.u32 %s71, 1
        %s2506 = scalar_lea.sflag [#allocation6], %s2505
        %s2507 = sand.u32 %s71, 1
        %s2508 = scalar_lea.vmem [#allocation5], %s2507
        // Predicated region
        $region29: #{tpu_custom_call.1} parent=27 // pred_check
          %p2509 = pneg %p81
        $region30: #{tpu_custom_call.1} parent=27 // pred_check_branch
          %2511 = sbr.rel (%p2509) target = $region32
        $region31: #{tpu_custom_call.1} parent=27 // pred_region
          %s2513 = ssub.s32 16, 16
          %2514 = vsyncadd %s2506, %s2513
          %s2515 = smul.addr %s16, 16
          %s2516 = scalar_lea.hbm %s2, %s2515
          %s2518 = sshll.u32 %s2508, 4
          %s2519 = int_to_ptr.vmem [resolvable:$true] %s2518
          %2521 = dma.vmem_to_hbm [thread:$0]  %s2519, 16, %s2516, %s2506
        $region32: #{tpu_custom_call.1} parent=27 // pred_fallthru
          _
      $region28: #{tpu_custom_call.1} parent=5 // pred_fallthru
        _
      %p2522 = scmp.le.s32.totalorder 2, %s11
      // Predicated region
      $region33: #{tpu_custom_call.1} parent=5 // pred_check
        %p2523 = pneg %p2522
      $region34: #{tpu_custom_call.1} parent=5 // pred_check_branch
        %2525 = sbr.rel (%p2523) target = $region36
      $region35: #{tpu_custom_call.1} parent=5 // pred_region
        %s2526 = ssub.s32 %s11, 2
        // Predicated region
        $region37: #{tpu_custom_call.1} parent=35 // pred_check
          %p2527 = pneg %p87
        $region38: #{tpu_custom_call.1} parent=35 // pred_check_branch
          %2529 = sbr.rel (%p2527) target = $region40
        $region39: #{tpu_custom_call.1} parent=35 // pred_region
          %s2530 = sand.u32 %s72, 1
          %s2531 = scalar_lea.sflag [#allocation6], %s2530
          %s2532 = sand.u32 %s72, 1
          %s2533 = scalar_lea.vmem [#allocation5], %s2532
          %2534 = dma.done %s2531, 16
        $region40: #{tpu_custom_call.1} parent=35 // pred_fallthru
          _
      $region36: #{tpu_custom_call.1} parent=5 // pred_fallthru
        _
    $region6: #{tpu_custom_call.1} parent=1 // loop_footer
      %s15 = sadd.s32 1, %s11
    $region7: #{tpu_custom_call.1} parent=1 // loop_footer_branch
      %10 = sbr.rel target = $region3
    $region8: #{tpu_custom_call.1} parent=1 // loop_exit
      _
    %2535 = vsyncpa [#allocation6], 1
    %s2536 = scalar_lea.sflag [#allocation6], 1
    %2537 = vsyncpa %s2536, 1

</llo_original>
